<compile_context>
chip_gen: v7x
topology: tpu7x:2x2x1
jax: 0.10.0
libtpu: 0.0.40
codegen_flags: <defaults>
</compile_context>

<pallas_src>
import functools
import types

import jax
import jax.numpy as jnp
from jax.experimental import pallas as pl
from jax.experimental.pallas import tpu as pltpu


# ----------------------------- config ---------------------------------------
class Cfg:
    WORD_EMBED_SIZE = 32
    HIDDEN_SIZE = 32
    FRAME_FEAT_SIZE = 48
    CLIP_FEAT_SIZE = 40
    FLAT_MLP_SIZE = 64
    FLAT_GLIMPSES = 1
    FLAT_OUT_SIZE = 64
    DROPOUT_R = 0.1      # inference: dropout is identity
    USE_GLOVE = False    # synthetic embedding table instead of GloVe


_VMEM = pl.BlockSpec(memory_space=pltpu.MemorySpace.VMEM)


# ----------------------------- packed-weight layout --------------------------
def make_layout(cfg, token_size, answer_size):
    """Row offsets inside the packed bf16 weight slab (16-row aligned so every
    static slice starts on a bf16 (16,128) tile boundary) and row indices in
    the f32 bias/vector slab."""
    r16 = lambda x: ((x + 15) // 16) * 16
    E, H = cfg.WORD_EMBED_SIZE, cfg.HIDDEN_SIZE
    DF, DC = cfg.FRAME_FEAT_SIZE, cfg.CLIP_FEAT_SIZE
    M, G, F = cfg.FLAT_MLP_SIZE, cfg.FLAT_GLIMPSES, cfg.FLAT_OUT_SIZE
    lay = types.SimpleNamespace(NV=r16(token_size), E=E, H=H, DF=DF, DC=DC,
                                M=M, G=G, F=F, A=answer_size)
    off = 0
    for name, rows in [("EMB", lay.NV), ("WIH", E), ("WHH", H), ("WFR", DF),
                       ("WCL", DC), ("LW1", H), ("VW1", H),
                       ("WM", 2 * H * G), ("WPRJ", F)]:
        setattr(lay, name, off)
        off += r16(rows)
    lay.WROWS = off

    v = 0
    for name, rows in [("B_LSTM", 1), ("B_FR", 1), ("B_CL", 1), ("LB1", 1),
                       ("VB1", 1), ("LW2", G), ("VW2", G), ("B2", 1), ("BM", 1),
                       ("LNG", 1), ("LNB", 1), ("BPRJ", 1)]:
        setattr(lay, name, v)
        v += rows
    lay.VROWS = v
    return lay


def _permute_gates(w, H):
    """Reorder PyTorch LSTM gate blocks (i,f,g,o) -> (i,f,o,g) on the last axis
    so the kernel can apply one sigmoid over cols [0,3H) and one tanh over
    [3H,4H)."""
    i, f, g, o = (w[..., k * H:(k + 1) * H] for k in range(4))
    return jnp.concatenate([i, f, o, g], axis=-1)


def pack_params(params, cfg, lay):
    """Offline (outside jit) packing: ONE bf16 weight slab + ONE f32 vector slab."""
    H, G, M = cfg.HIDDEN_SIZE, cfg.FLAT_GLIMPSES, cfg.FLAT_MLP_SIZE
    afl, afv = params["af_lang"], params["af_vid"]

    W = jnp.zeros((lay.WROWS, 128), jnp.float32)

    def put(W, row, a):
        return W.at[row:row + a.shape[0], 0:a.shape[1]].set(a)

    W = put(W, lay.EMB, params["emb"])
    W = put(W, lay.WIH, _permute_gates(params["w_ih"], H))
    W = put(W, lay.WHH, _permute_gates(params["w_hh"], H))
    W = put(W, lay.WFR, params["w_frame"])
    W = put(W, lay.WCL, params["w_clip"])
    W = put(W, lay.LW1, afl["w1"])
    W = put(W, lay.VW1, afv["w1"])
    # fused linear_merge: [pooled_lang | pooled_vid] @ [[lwm];[vwm]] == sum of flats
    W = put(W, lay.WM, jnp.concatenate([afl["wm"], afv["wm"]], axis=0))
    W = put(W, lay.WPRJ, params["w_proj"])

    V = jnp.zeros((lay.VROWS, 128), jnp.float32)

    def putv(V, row, vec):
        return V.at[row, 0:vec.shape[-1]].set(vec)

    V = putv(V, lay.B_LSTM, _permute_gates(params["b_ih"] + params["b_hh"], H))
    V = putv(V, lay.B_FR, params["b_frame"])
    V = putv(V, lay.B_CL, params["b_clip"])
    V = putv(V, lay.LB1, afl["b1"])
    V = putv(V, lay.VB1, afv["b1"])
    V = V.at[lay.LW2:lay.LW2 + G, 0:M].set(afl["w2"].T)
    V = V.at[lay.VW2:lay.VW2 + G, 0:M].set(afv["w2"].T)
    V = V.at[lay.B2, 0:G].set(afl["b2"])
    V = V.at[lay.B2, G:2 * G].set(afv["b2"])
    V = putv(V, lay.BM, afl["bm"] + afv["bm"])       # fused residual bias
    V = putv(V, lay.LNG, params["ln_g"])
    V = putv(V, lay.LNB, params["ln_b"])
    V = putv(V, lay.BPRJ, params["b_proj"])

    return {"W": W.astype(jnp.bfloat16), "V": V}


# ----------------------------- fused Net4 kernel -----------------------------
def _net4_kernel(ques_ref, frame_ref, clip_ref, w_ref, v_ref, out_ref,
                 lang_ref, *, lay):
    B, Tq, _ = ques_ref.shape
    _, Tf, DF = frame_ref.shape
    _, Tc, DC = clip_ref.shape
    H, E, M, G, F, A, NV = lay.H, lay.E, lay.M, lay.G, lay.F, lay.A, lay.NV

    def mm(a, wb):  # MXU: activation cast to bf16 in-kernel; weights are already bf16
        return jnp.dot(a.astype(jnp.bfloat16), wb, preferred_element_type=jnp.float32)

    def vrow(r, n):  # f32 bias / vector row [1, n]
        return v_ref[r:r + 1, 0:n]

    # ---------------- masks (bool, computed from resident tiles) -------------
    q = ques_ref[...]                                              # [B, Tq, 1] int32
    lang_mask = q == 0                                             # [B, Tq, 1] bool
    frame = frame_ref[...]                                         # [B, Tf, DF]
    clip = clip_ref[...]                                           # [B, Tc, DC]
    frame_abs = jnp.sum(jnp.abs(frame), axis=-1, keepdims=True)
    clip_abs = jnp.sum(jnp.abs(clip), axis=-1, keepdims=True)
    vid_mask = jnp.concatenate([frame_abs, clip_abs], axis=1) == 0.0  # [B,Tf+Tc,1]

    # ---------------- embedding lookup: one-hot @ VMEM-resident table --------
    iota = jax.lax.broadcasted_iota(jnp.int32, (B, Tq, NV), 2)
    onehot = (iota == q).astype(jnp.float32)                       # [B, Tq, NV]
    emb_w = w_ref[lay.EMB:lay.EMB + NV, 0:E]                       # bf16 [NV, E]
    xe = mm(onehot.reshape(B * Tq, NV), emb_w)                     # [B*Tq, E] f32

    # ---------------- LSTM: hoisted input projection, unrolled recurrence ----
    w_ih = w_ref[lay.WIH:lay.WIH + E, :]                           # bf16 [E, 4H]
    w_hh = w_ref[lay.WHH:lay.WHH + H, :]                           # bf16 [H, 4H]
    gx = (mm(xe, w_ih) + vrow(lay.B_LSTM, 4 * H)).reshape(B, Tq, 4 * H)
    h = jnp.zeros((B, H), jnp.float32)
    c = jnp.zeros((B, H), jnp.float32)
    for t in range(Tq):                        # Tq static -> fully unrolled
        gates = gx[:, t, :] + mm(h, w_hh)                          # [B, 4H]
        sig = jax.nn.sigmoid(gates[:, 0:3 * H])   # gate cols pre-permuted (i,f,o,g)
        g_g = jnp.tanh(gates[:, 3 * H:4 * H])
        c = sig[:, H:2 * H] * c + sig[:, 0:H] * g_g
        h = sig[:, 2 * H:3 * H] * jnp.tanh(c)
        lang_ref[:, t, :] = h                  # direct VMEM scratch store
    lang_feat = lang_ref[...]                                      # [B, Tq, H]

    # ---------------- frame / clip projections + time concat -----------------
    w_fr = w_ref[lay.WFR:lay.WFR + DF, 0:H]
    w_cl = w_ref[lay.WCL:lay.WCL + DC, 0:H]
    frame_h = (mm(frame.reshape(B * Tf, DF), w_fr)
               + vrow(lay.B_FR, H)).reshape(B, Tf, H)
    clip_h = (mm(clip.reshape(B * Tc, DC), w_cl)
              + vrow(lay.B_CL, H)).reshape(B, Tc, H)
    vid_feat = jnp.concatenate([frame_h, clip_h], axis=1)          # [B, Tf+Tc, H]

    # TODO(synk): MCA_ED backbone definition was not provided with the module;
    # treated as an identity pass-through on (lang_feat, vid_feat).

    # ---------------- AttFlat pooled part (merge fused below) ----------------
    def attflat_pool(x, mask, w1_off, b1_row, w2_row, b2_col):
        b, T, _ = x.shape
        w1 = w_ref[w1_off:w1_off + H, 0:M]
        hid = jnp.maximum(mm(x.reshape(b * T, H), w1) + vrow(b1_row, M), 0.0)
        hid = hid.reshape(b, T, M)
        pooled = []
        for g in range(G):
            w2g = v_ref[w2_row + g:w2_row + g + 1, 0:M]            # [1, M]
            b2g = v_ref[lay.B2:lay.B2 + 1, b2_col + g:b2_col + g + 1]  # [1, 1]
            logit = jnp.sum(hid * w2g, axis=-1, keepdims=True) + b2g   # [b, T, 1]
            att = jnp.where(mask, -1.0e9, logit)
            att = att - jnp.max(att, axis=1, keepdims=True)        # softmax over T
            e = jnp.exp(att)
            att = e / jnp.sum(e, axis=1, keepdims=True)
            pooled.append(jnp.sum(att * x, axis=1))                # [b, H]
        return pooled[0] if G == 1 else jnp.concatenate(pooled, axis=-1)

    lang_pool = attflat_pool(lang_feat, lang_mask, lay.LW1, lay.LB1, lay.LW2, 0)
    vid_pool = attflat_pool(vid_feat, vid_mask, lay.VW1, lay.VB1, lay.VW2, G)

    # fused linear_merge + residual: one [B,2HG]x[2HG,F] matmul == lang_flat+vid_flat
    pooled = jnp.concatenate([lang_pool, vid_pool], axis=-1)       # [B, 2*H*G]
    w_m = w_ref[lay.WM:lay.WM + 2 * H * G, 0:F]
    x = mm(pooled, w_m) + vrow(lay.BM, F)                          # [B, F]

    # ---------------- MCAN LayerNorm (unbiased std, eps on std) + head -------
    mean = jnp.mean(x, axis=-1, keepdims=True)
    diff = x - mean
    std = jnp.sqrt(jnp.sum(diff * diff, axis=-1, keepdims=True) / (F - 1))
    xn = vrow(lay.LNG, F) * diff / (std + 1e-6) + vrow(lay.LNB, F)
    w_p = w_ref[lay.WPRJ:lay.WPRJ + F, 0:A]
    out_ref[...] = jax.nn.sigmoid(mm(xn, w_p) + vrow(lay.BPRJ, A))


# ----------------------------- parameters ------------------------------------
def init_params(key, cfg, token_size, answer_size):
    ks = jax.random.split(key, 8)

    def dense(k, din, dout, scale=0.05):
        kw, kb = jax.random.split(k)
        return (scale * jax.random.normal(kw, (din, dout), jnp.float32),
                scale * jax.random.normal(kb, (dout,), jnp.float32))

    H, E = cfg.HIDDEN_SIZE, cfg.WORD_EMBED_SIZE
    p = {}
    p["emb"] = 0.05 * jax.random.normal(ks[0], (token_size, E), jnp.float32)
    p["w_ih"], p["b_ih"] = dense(ks[1], E, 4 * H)    # PyTorch gate order (i,f,g,o)
    p["w_hh"], p["b_hh"] = dense(ks[2], H, 4 * H)
    p["w_frame"], p["b_frame"] = dense(ks[3], cfg.FRAME_FEAT_SIZE, H)
    p["w_clip"], p["b_clip"] = dense(ks[4], cfg.CLIP_FEAT_SIZE, H)

    def attflat_params(k):
        k1, k2, k3 = jax.random.split(k, 3)
        w1, b1 = dense(k1, H, cfg.FLAT_MLP_SIZE)
        w2, b2 = dense(k2, cfg.FLAT_MLP_SIZE, cfg.FLAT_GLIMPSES)
        wm, bm = dense(k3, H * cfg.FLAT_GLIMPSES, cfg.FLAT_OUT_SIZE)
        return dict(w1=w1, b1=b1, w2=w2, b2=b2, wm=wm, bm=bm)

    p["af_lang"] = attflat_params(ks[5])
    p["af_vid"] = attflat_params(ks[6])
    p["ln_g"] = jnp.ones((cfg.FLAT_OUT_SIZE,), jnp.float32)
    p["ln_b"] = jnp.zeros((cfg.FLAT_OUT_SIZE,), jnp.float32)
    p["w_proj"], p["b_proj"] = dense(ks[7], cfg.FLAT_OUT_SIZE, answer_size)
    return p


# ----------------------------- Net4 forward ----------------------------------
def net4_forward(packed, frame_feat, clip_feat, ques_ix, *, cfg, lay):
    B, Tq = ques_ix.shape
    return pl.pallas_call(
        functools.partial(_net4_kernel, lay=lay),
        out_shape=jax.ShapeDtypeStruct((B, lay.A), jnp.float32),
        in_specs=[_VMEM] * 5,
        out_specs=_VMEM,
        scratch_shapes=[pltpu.VMEM((B, Tq, cfg.HIDDEN_SIZE), jnp.float32)],
    )(ques_ix.reshape(B, Tq, 1), frame_feat, clip_feat, packed["W"], packed["V"])


# ----------------------------- main ------------------------------------------
if __name__ == "__main__":
    cfg = Cfg()
    token_size = 50
    answer_size = 10
    B, Tq, Tf, Tc = 2, 8, 16, 8

    key = jax.random.PRNGKey(0)
    kp, kq, kf, kc = jax.random.split(key, 4)
    params = init_params(kp, cfg, token_size, answer_size)
    lay = make_layout(cfg, token_size, answer_size)
    packed = pack_params(params, cfg, lay)           # offline, outside jit

    ques_ix = jax.random.randint(kq, (B, Tq), 1, token_size, dtype=jnp.int32)
    ques_ix = ques_ix.at[:, -2:].set(0)                     # padded tokens
    frame_feat = jax.random.normal(kf, (B, Tf, cfg.FRAME_FEAT_SIZE), jnp.float32)
    frame_feat = frame_feat.at[:, -3:, :].set(0.0)          # padded frames
    clip_feat = jax.random.normal(kc, (B, Tc, cfg.CLIP_FEAT_SIZE), jnp.float32)
    clip_feat = clip_feat.at[:, -2:, :].set(0.0)            # padded clips

    fwd = jax.jit(functools.partial(net4_forward, cfg=cfg, lay=lay))
    out = jax.block_until_ready(fwd(packed, frame_feat, clip_feat, ques_ix))

    assert out.shape == (B, answer_size), out.shape
    assert bool(jnp.all(jnp.isfinite(out)))
    assert bool(jnp.all((out >= 0.0) & (out <= 1.0)))       # sigmoid output range
    print("KERNEL_OK")
</pallas_src>

<mosaic_0001>
module attributes {stable_mosaic.version = 11 : i64} {
  func.func @_net4_kernel(%arg0: memref<2x8x1xi32, #tpu.memory_space<vmem>>, %arg1: memref<2x16x48xf32, #tpu.memory_space<vmem>>, %arg2: memref<2x8x40xf32, #tpu.memory_space<vmem>>, %arg3: memref<416x128xbf16, #tpu.memory_space<vmem>>, %arg4: memref<12x128xf32, #tpu.memory_space<vmem>>, %arg5: memref<2x10xf32, #tpu.memory_space<vmem>>, %arg6: memref<2x8x32xf32, #tpu.memory_space<vmem>>) attributes {dimension_semantics = [], scalar_prefetch = 0 : i64, scratch_operands = 1 : i64, tpu.core_type = #tpu.core_type<tc>} {
    %c0 = arith.constant 0 : index
    %c0_0 = arith.constant 0 : index
    %c0_1 = arith.constant 0 : index
    %0 = vector.load %arg0[%c0, %c0_0, %c0_1] : memref<2x8x1xi32, #tpu.memory_space<vmem>>, vector<2x8x1xi32>
    %c0_i32 = arith.constant 0 : i32
    %1 = vector.broadcast %c0_i32 : i32 to vector<2x8x1xi32>
    %2 = arith.cmpi eq, %0, %1 : vector<2x8x1xi32>
    %c0_2 = arith.constant 0 : index
    %c0_3 = arith.constant 0 : index
    %c0_4 = arith.constant 0 : index
    %3 = vector.load %arg1[%c0_2, %c0_3, %c0_4] : memref<2x16x48xf32, #tpu.memory_space<vmem>>, vector<2x16x48xf32>
    %c0_5 = arith.constant 0 : index
    %c0_6 = arith.constant 0 : index
    %c0_7 = arith.constant 0 : index
    %4 = vector.load %arg2[%c0_5, %c0_6, %c0_7] : memref<2x8x40xf32, #tpu.memory_space<vmem>>, vector<2x8x40xf32>
    %5 = math.absf %3 : vector<2x16x48xf32>
    %cst = arith.constant dense<0.000000e+00> : vector<2x16xf32>
    %6 = vector.multi_reduction <add>, %5, %cst [2] : vector<2x16x48xf32> to vector<2x16xf32>
    %7 = vector.shape_cast %6 : vector<2x16xf32> to vector<2x16x1xf32>
    %8 = math.absf %4 : vector<2x8x40xf32>
    %cst_8 = arith.constant dense<0.000000e+00> : vector<2x8xf32>
    %9 = vector.multi_reduction <add>, %8, %cst_8 [2] : vector<2x8x40xf32> to vector<2x8xf32>
    %10 = vector.shape_cast %9 : vector<2x8xf32> to vector<2x8x1xf32>
    %11 = tpu.concatenate %7, %10 in 1 : vector<2x16x1xf32>, vector<2x8x1xf32> -> vector<2x24x1xf32>
    %cst_9 = arith.constant 0.000000e+00 : f32
    %12 = vector.broadcast %cst_9 : f32 to vector<2x24x1xf32>
    %13 = arith.cmpf oeq, %11, %12 : vector<2x24x1xf32>
    %14 = tpu.iota {dimensions = array<i32: 2>} : vector<2x8x64xi32>
    %15 = vector.broadcast %0 : vector<2x8x1xi32> to vector<2x8x64xi32>
    %16 = arith.cmpi eq, %14, %15 : vector<2x8x64xi32>
    %17 = arith.extui %16 : vector<2x8x64xi1> to vector<2x8x64xi32>
    %18 = arith.sitofp %17 : vector<2x8x64xi32> to vector<2x8x64xf32>
    %c0_10 = arith.constant 0 : index
    %c0_11 = arith.constant 0 : index
    %19 = vector.load %arg3[%c0_10, %c0_11] : memref<416x128xbf16, #tpu.memory_space<vmem>>, vector<64x32xbf16>
    %20 = vector.shape_cast %18 : vector<2x8x64xf32> to vector<16x64xf32>
    %21 = arith.truncf %20 : vector<16x64xf32> to vector<16x64xbf16>
    %cst_12 = arith.constant dense<0.000000e+00> : vector<16x32xf32>
    %22 = tpu.matmul %21, %19, %cst_12 {dimension_numbers = #tpu.dot_dimension_numbers<[1], [0], [0], [1], [0, 0, 1, 1], [], []>} : vector<16x64xbf16>, vector<64x32xbf16>, vector<16x32xf32> -> vector<16x32xf32>
    %c64 = arith.constant 64 : index
    %c0_13 = arith.constant 0 : index
    %23 = vector.load %arg3[%c64, %c0_13] : memref<416x128xbf16, #tpu.memory_space<vmem>>, vector<32x128xbf16>
    %c96 = arith.constant 96 : index
    %c0_14 = arith.constant 0 : index
    %24 = vector.load %arg3[%c96, %c0_14] : memref<416x128xbf16, #tpu.memory_space<vmem>>, vector<32x128xbf16>
    %25 = arith.truncf %22 : vector<16x32xf32> to vector<16x32xbf16>
    %cst_15 = arith.constant dense<0.000000e+00> : vector<16x128xf32>
    %26 = tpu.matmul %25, %23, %cst_15 {dimension_numbers = #tpu.dot_dimension_numbers<[1], [0], [0], [1], [0, 0, 1, 1], [], []>} : vector<16x32xbf16>, vector<32x128xbf16>, vector<16x128xf32> -> vector<16x128xf32>
    %c0_16 = arith.constant 0 : index
    %c0_17 = arith.constant 0 : index
    %27 = vector.load %arg4[%c0_16, %c0_17] : memref<12x128xf32, #tpu.memory_space<vmem>>, vector<1x128xf32>
    %28 = vector.broadcast %27 : vector<1x128xf32> to vector<16x128xf32>
    %29 = arith.addf %26, %28 : vector<16x128xf32>
    %30 = vector.shape_cast %29 : vector<16x128xf32> to vector<2x8x128xf32>
    %cst_18 = arith.constant 0.000000e+00 : f32
    %31 = vector.broadcast %cst_18 : f32 to vector<2x32xf32>
    %cst_19 = arith.constant 0.000000e+00 : f32
    %32 = vector.broadcast %cst_19 : f32 to vector<2x32xf32>
    %33 = vector.extract_strided_slice %30 {offsets = [0, 0, 0], sizes = [2, 1, 128], strides = [1, 1, 1]} : vector<2x8x128xf32> to vector<2x1x128xf32>
    %34 = vector.shape_cast %33 : vector<2x1x128xf32> to vector<2x128xf32>
    %35 = arith.truncf %31 : vector<2x32xf32> to vector<2x32xbf16>
    %cst_20 = arith.constant dense<0.000000e+00> : vector<2x128xf32>
    %36 = tpu.matmul %35, %24, %cst_20 {dimension_numbers = #tpu.dot_dimension_numbers<[1], [0], [0], [1], [0, 0, 1, 1], [], []>} : vector<2x32xbf16>, vector<32x128xbf16>, vector<2x128xf32> -> vector<2x128xf32>
    %37 = arith.addf %34, %36 : vector<2x128xf32>
    %38 = vector.extract_strided_slice %37 {offsets = [0, 0], sizes = [2, 96], strides = [1, 1]} : vector<2x128xf32> to vector<2x96xf32>
    %39 = arith.negf %38 : vector<2x96xf32>
    %40 = math.exp %39 : vector<2x96xf32>
    %cst_21 = arith.constant 1.000000e+00 : f32
    %41 = vector.broadcast %cst_21 : f32 to vector<2x96xf32>
    %42 = arith.addf %41, %40 : vector<2x96xf32>
    %43 = arith.divf %41, %42 : vector<2x96xf32>
    %44 = vector.extract_strided_slice %37 {offsets = [0, 96], sizes = [2, 32], strides = [1, 1]} : vector<2x128xf32> to vector<2x32xf32>
    %45 = math.tanh %44 : vector<2x32xf32>
    %46 = vector.extract_strided_slice %43 {offsets = [0, 32], sizes = [2, 32], strides = [1, 1]} : vector<2x96xf32> to vector<2x32xf32>
    %47 = arith.mulf %46, %32 : vector<2x32xf32>
    %48 = vector.extract_strided_slice %43 {offsets = [0, 0], sizes = [2, 32], strides = [1, 1]} : vector<2x96xf32> to vector<2x32xf32>
    %49 = arith.mulf %48, %45 : vector<2x32xf32>
    %50 = arith.addf %47, %49 : vector<2x32xf32>
    %51 = vector.extract_strided_slice %43 {offsets = [0, 64], sizes = [2, 32], strides = [1, 1]} : vector<2x96xf32> to vector<2x32xf32>
    %52 = math.tanh %50 : vector<2x32xf32>
    %53 = arith.mulf %51, %52 : vector<2x32xf32>
    %c0_22 = arith.constant 0 : index
    %c0_23 = arith.constant 0 : index
    %c0_24 = arith.constant 0 : index
    %54 = vector.load %arg6[%c0_22, %c0_23, %c0_24] : memref<2x8x32xf32, #tpu.memory_space<vmem>>, vector<2x1x32xf32>
    %55 = vector.shape_cast %54 : vector<2x1x32xf32> to vector<2x32xf32>
    %56 = vector.shape_cast %53 : vector<2x32xf32> to vector<2x1x32xf32>
    tpu.vector_store %arg6[%c0_22, %c0_23, %c0_24], %56 {strides = array<i32>} : memref<2x8x32xf32, #tpu.memory_space<vmem>>, vector<2x1x32xf32>,
    %57 = vector.extract_strided_slice %30 {offsets = [0, 1, 0], sizes = [2, 1, 128], strides = [1, 1, 1]} : vector<2x8x128xf32> to vector<2x1x128xf32>
    %58 = vector.shape_cast %57 : vector<2x1x128xf32> to vector<2x128xf32>
    %59 = arith.truncf %53 : vector<2x32xf32> to vector<2x32xbf16>
    %cst_25 = arith.constant dense<0.000000e+00> : vector<2x128xf32>
    %60 = tpu.matmul %59, %24, %cst_25 {dimension_numbers = #tpu.dot_dimension_numbers<[1], [0], [0], [1], [0, 0, 1, 1], [], []>} : vector<2x32xbf16>, vector<32x128xbf16>, vector<2x128xf32> -> vector<2x128xf32>
    %61 = arith.addf %58, %60 : vector<2x128xf32>
    %62 = vector.extract_strided_slice %61 {offsets = [0, 0], sizes = [2, 96], strides = [1, 1]} : vector<2x128xf32> to vector<2x96xf32>
    %63 = arith.negf %62 : vector<2x96xf32>
    %64 = math.exp %63 : vector<2x96xf32>
    %cst_26 = arith.constant 1.000000e+00 : f32
    %65 = vector.broadcast %cst_26 : f32 to vector<2x96xf32>
    %66 = arith.addf %65, %64 : vector<2x96xf32>
    %67 = arith.divf %65, %66 : vector<2x96xf32>
    %68 = vector.extract_strided_slice %61 {offsets = [0, 96], sizes = [2, 32], strides = [1, 1]} : vector<2x128xf32> to vector<2x32xf32>
    %69 = math.tanh %68 : vector<2x32xf32>
    %70 = vector.extract_strided_slice %67 {offsets = [0, 32], sizes = [2, 32], strides = [1, 1]} : vector<2x96xf32> to vector<2x32xf32>
    %71 = arith.mulf %70, %50 : vector<2x32xf32>
    %72 = vector.extract_strided_slice %67 {offsets = [0, 0], sizes = [2, 32], strides = [1, 1]} : vector<2x96xf32> to vector<2x32xf32>
    %73 = arith.mulf %72, %69 : vector<2x32xf32>
    %74 = arith.addf %71, %73 : vector<2x32xf32>
    %75 = vector.extract_strided_slice %67 {offsets = [0, 64], sizes = [2, 32], strides = [1, 1]} : vector<2x96xf32> to vector<2x32xf32>
    %76 = math.tanh %74 : vector<2x32xf32>
    %77 = arith.mulf %75, %76 : vector<2x32xf32>
    %c0_27 = arith.constant 0 : index
    %c1 = arith.constant 1 : index
    %c0_28 = arith.constant 0 : index
    %78 = vector.load %arg6[%c0_27, %c1, %c0_28] : memref<2x8x32xf32, #tpu.memory_space<vmem>>, vector<2x1x32xf32>
    %79 = vector.shape_cast %78 : vector<2x1x32xf32> to vector<2x32xf32>
    %80 = vector.shape_cast %77 : vector<2x32xf32> to vector<2x1x32xf32>
    tpu.vector_store %arg6[%c0_27, %c1, %c0_28], %80 {strides = array<i32>} : memref<2x8x32xf32, #tpu.memory_space<vmem>>, vector<2x1x32xf32>,
    %81 = vector.extract_strided_slice %30 {offsets = [0, 2, 0], sizes = [2, 1, 128], strides = [1, 1, 1]} : vector<2x8x128xf32> to vector<2x1x128xf32>
    %82 = vector.shape_cast %81 : vector<2x1x128xf32> to vector<2x128xf32>
    %83 = arith.truncf %77 : vector<2x32xf32> to vector<2x32xbf16>
    %cst_29 = arith.constant dense<0.000000e+00> : vector<2x128xf32>
    %84 = tpu.matmul %83, %24, %cst_29 {dimension_numbers = #tpu.dot_dimension_numbers<[1], [0], [0], [1], [0, 0, 1, 1], [], []>} : vector<2x32xbf16>, vector<32x128xbf16>, vector<2x128xf32> -> vector<2x128xf32>
    %85 = arith.addf %82, %84 : vector<2x128xf32>
    %86 = vector.extract_strided_slice %85 {offsets = [0, 0], sizes = [2, 96], strides = [1, 1]} : vector<2x128xf32> to vector<2x96xf32>
    %87 = arith.negf %86 : vector<2x96xf32>
    %88 = math.exp %87 : vector<2x96xf32>
    %cst_30 = arith.constant 1.000000e+00 : f32
    %89 = vector.broadcast %cst_30 : f32 to vector<2x96xf32>
    %90 = arith.addf %89, %88 : vector<2x96xf32>
    %91 = arith.divf %89, %90 : vector<2x96xf32>
    %92 = vector.extract_strided_slice %85 {offsets = [0, 96], sizes = [2, 32], strides = [1, 1]} : vector<2x128xf32> to vector<2x32xf32>
    %93 = math.tanh %92 : vector<2x32xf32>
    %94 = vector.extract_strided_slice %91 {offsets = [0, 32], sizes = [2, 32], strides = [1, 1]} : vector<2x96xf32> to vector<2x32xf32>
    %95 = arith.mulf %94, %74 : vector<2x32xf32>
    %96 = vector.extract_strided_slice %91 {offsets = [0, 0], sizes = [2, 32], strides = [1, 1]} : vector<2x96xf32> to vector<2x32xf32>
    %97 = arith.mulf %96, %93 : vector<2x32xf32>
    %98 = arith.addf %95, %97 : vector<2x32xf32>
    %99 = vector.extract_strided_slice %91 {offsets = [0, 64], sizes = [2, 32], strides = [1, 1]} : vector<2x96xf32> to vector<2x32xf32>
    %100 = math.tanh %98 : vector<2x32xf32>
    %101 = arith.mulf %99, %100 : vector<2x32xf32>
    %c0_31 = arith.constant 0 : index
    %c2 = arith.constant 2 : index
    %c0_32 = arith.constant 0 : index
    %102 = vector.load %arg6[%c0_31, %c2, %c0_32] : memref<2x8x32xf32, #tpu.memory_space<vmem>>, vector<2x1x32xf32>
    %103 = vector.shape_cast %102 : vector<2x1x32xf32> to vector<2x32xf32>
    %104 = vector.shape_cast %101 : vector<2x32xf32> to vector<2x1x32xf32>
    tpu.vector_store %arg6[%c0_31, %c2, %c0_32], %104 {strides = array<i32>} : memref<2x8x32xf32, #tpu.memory_space<vmem>>, vector<2x1x32xf32>,
    %105 = vector.extract_strided_slice %30 {offsets = [0, 3, 0], sizes = [2, 1, 128], strides = [1, 1, 1]} : vector<2x8x128xf32> to vector<2x1x128xf32>
    %106 = vector.shape_cast %105 : vector<2x1x128xf32> to vector<2x128xf32>
    %107 = arith.truncf %101 : vector<2x32xf32> to vector<2x32xbf16>
    %cst_33 = arith.constant dense<0.000000e+00> : vector<2x128xf32>
    %108 = tpu.matmul %107, %24, %cst_33 {dimension_numbers = #tpu.dot_dimension_numbers<[1], [0], [0], [1], [0, 0, 1, 1], [], []>} : vector<2x32xbf16>, vector<32x128xbf16>, vector<2x128xf32> -> vector<2x128xf32>
    %109 = arith.addf %106, %108 : vector<2x128xf32>
    %110 = vector.extract_strided_slice %109 {offsets = [0, 0], sizes = [2, 96], strides = [1, 1]} : vector<2x128xf32> to vector<2x96xf32>
    %111 = arith.negf %110 : vector<2x96xf32>
    %112 = math.exp %111 : vector<2x96xf32>
    %cst_34 = arith.constant 1.000000e+00 : f32
    %113 = vector.broadcast %cst_34 : f32 to vector<2x96xf32>
    %114 = arith.addf %113, %112 : vector<2x96xf32>
    %115 = arith.divf %113, %114 : vector<2x96xf32>
    %116 = vector.extract_strided_slice %109 {offsets = [0, 96], sizes = [2, 32], strides = [1, 1]} : vector<2x128xf32> to vector<2x32xf32>
    %117 = math.tanh %116 : vector<2x32xf32>
    %118 = vector.extract_strided_slice %115 {offsets = [0, 32], sizes = [2, 32], strides = [1, 1]} : vector<2x96xf32> to vector<2x32xf32>
    %119 = arith.mulf %118, %98 : vector<2x32xf32>
    %120 = vector.extract_strided_slice %115 {offsets = [0, 0], sizes = [2, 32], strides = [1, 1]} : vector<2x96xf32> to vector<2x32xf32>
    %121 = arith.mulf %120, %117 : vector<2x32xf32>
    %122 = arith.addf %119, %121 : vector<2x32xf32>
    %123 = vector.extract_strided_slice %115 {offsets = [0, 64], sizes = [2, 32], strides = [1, 1]} : vector<2x96xf32> to vector<2x32xf32>
    %124 = math.tanh %122 : vector<2x32xf32>
    %125 = arith.mulf %123, %124 : vector<2x32xf32>
    %c0_35 = arith.constant 0 : index
    %c3 = arith.constant 3 : index
    %c0_36 = arith.constant 0 : index
    %126 = vector.load %arg6[%c0_35, %c3, %c0_36] : memref<2x8x32xf32, #tpu.memory_space<vmem>>, vector<2x1x32xf32>
    %127 = vector.shape_cast %126 : vector<2x1x32xf32> to vector<2x32xf32>
    %128 = vector.shape_cast %125 : vector<2x32xf32> to vector<2x1x32xf32>
    tpu.vector_store %arg6[%c0_35, %c3, %c0_36], %128 {strides = array<i32>} : memref<2x8x32xf32, #tpu.memory_space<vmem>>, vector<2x1x32xf32>,
    %129 = vector.extract_strided_slice %30 {offsets = [0, 4, 0], sizes = [2, 1, 128], strides = [1, 1, 1]} : vector<2x8x128xf32> to vector<2x1x128xf32>
    %130 = vector.shape_cast %129 : vector<2x1x128xf32> to vector<2x128xf32>
    %131 = arith.truncf %125 : vector<2x32xf32> to vector<2x32xbf16>
    %cst_37 = arith.constant dense<0.000000e+00> : vector<2x128xf32>
    %132 = tpu.matmul %131, %24, %cst_37 {dimension_numbers = #tpu.dot_dimension_numbers<[1], [0], [0], [1], [0, 0, 1, 1], [], []>} : vector<2x32xbf16>, vector<32x128xbf16>, vector<2x128xf32> -> vector<2x128xf32>
    %133 = arith.addf %130, %132 : vector<2x128xf32>
    %134 = vector.extract_strided_slice %133 {offsets = [0, 0], sizes = [2, 96], strides = [1, 1]} : vector<2x128xf32> to vector<2x96xf32>
    %135 = arith.negf %134 : vector<2x96xf32>
    %136 = math.exp %135 : vector<2x96xf32>
    %cst_38 = arith.constant 1.000000e+00 : f32
    %137 = vector.broadcast %cst_38 : f32 to vector<2x96xf32>
    %138 = arith.addf %137, %136 : vector<2x96xf32>
    %139 = arith.divf %137, %138 : vector<2x96xf32>
    %140 = vector.extract_strided_slice %133 {offsets = [0, 96], sizes = [2, 32], strides = [1, 1]} : vector<2x128xf32> to vector<2x32xf32>
    %141 = math.tanh %140 : vector<2x32xf32>
    %142 = vector.extract_strided_slice %139 {offsets = [0, 32], sizes = [2, 32], strides = [1, 1]} : vector<2x96xf32> to vector<2x32xf32>
    %143 = arith.mulf %142, %122 : vector<2x32xf32>
    %144 = vector.extract_strided_slice %139 {offsets = [0, 0], sizes = [2, 32], strides = [1, 1]} : vector<2x96xf32> to vector<2x32xf32>
    %145 = arith.mulf %144, %141 : vector<2x32xf32>
    %146 = arith.addf %143, %145 : vector<2x32xf32>
    %147 = vector.extract_strided_slice %139 {offsets = [0, 64], sizes = [2, 32], strides = [1, 1]} : vector<2x96xf32> to vector<2x32xf32>
    %148 = math.tanh %146 : vector<2x32xf32>
    %149 = arith.mulf %147, %148 : vector<2x32xf32>
    %c0_39 = arith.constant 0 : index
    %c4 = arith.constant 4 : index
    %c0_40 = arith.constant 0 : index
    %150 = vector.load %arg6[%c0_39, %c4, %c0_40] : memref<2x8x32xf32, #tpu.memory_space<vmem>>, vector<2x1x32xf32>
    %151 = vector.shape_cast %150 : vector<2x1x32xf32> to vector<2x32xf32>
    %152 = vector.shape_cast %149 : vector<2x32xf32> to vector<2x1x32xf32>
    tpu.vector_store %arg6[%c0_39, %c4, %c0_40], %152 {strides = array<i32>} : memref<2x8x32xf32, #tpu.memory_space<vmem>>, vector<2x1x32xf32>,
    %153 = vector.extract_strided_slice %30 {offsets = [0, 5, 0], sizes = [2, 1, 128], strides = [1, 1, 1]} : vector<2x8x128xf32> to vector<2x1x128xf32>
    %154 = vector.shape_cast %153 : vector<2x1x128xf32> to vector<2x128xf32>
    %155 = arith.truncf %149 : vector<2x32xf32> to vector<2x32xbf16>
    %cst_41 = arith.constant dense<0.000000e+00> : vector<2x128xf32>
    %156 = tpu.matmul %155, %24, %cst_41 {dimension_numbers = #tpu.dot_dimension_numbers<[1], [0], [0], [1], [0, 0, 1, 1], [], []>} : vector<2x32xbf16>, vector<32x128xbf16>, vector<2x128xf32> -> vector<2x128xf32>
    %157 = arith.addf %154, %156 : vector<2x128xf32>
    %158 = vector.extract_strided_slice %157 {offsets = [0, 0], sizes = [2, 96], strides = [1, 1]} : vector<2x128xf32> to vector<2x96xf32>
    %159 = arith.negf %158 : vector<2x96xf32>
    %160 = math.exp %159 : vector<2x96xf32>
    %cst_42 = arith.constant 1.000000e+00 : f32
    %161 = vector.broadcast %cst_42 : f32 to vector<2x96xf32>
    %162 = arith.addf %161, %160 : vector<2x96xf32>
    %163 = arith.divf %161, %162 : vector<2x96xf32>
    %164 = vector.extract_strided_slice %157 {offsets = [0, 96], sizes = [2, 32], strides = [1, 1]} : vector<2x128xf32> to vector<2x32xf32>
    %165 = math.tanh %164 : vector<2x32xf32>
    %166 = vector.extract_strided_slice %163 {offsets = [0, 32], sizes = [2, 32], strides = [1, 1]} : vector<2x96xf32> to vector<2x32xf32>
    %167 = arith.mulf %166, %146 : vector<2x32xf32>
    %168 = vector.extract_strided_slice %163 {offsets = [0, 0], sizes = [2, 32], strides = [1, 1]} : vector<2x96xf32> to vector<2x32xf32>
    %169 = arith.mulf %168, %165 : vector<2x32xf32>
    %170 = arith.addf %167, %169 : vector<2x32xf32>
    %171 = vector.extract_strided_slice %163 {offsets = [0, 64], sizes = [2, 32], strides = [1, 1]} : vector<2x96xf32> to vector<2x32xf32>
    %172 = math.tanh %170 : vector<2x32xf32>
    %173 = arith.mulf %171, %172 : vector<2x32xf32>
    %c0_43 = arith.constant 0 : index
    %c5 = arith.constant 5 : index
    %c0_44 = arith.constant 0 : index
    %174 = vector.load %arg6[%c0_43, %c5, %c0_44] : memref<2x8x32xf32, #tpu.memory_space<vmem>>, vector<2x1x32xf32>
    %175 = vector.shape_cast %174 : vector<2x1x32xf32> to vector<2x32xf32>
    %176 = vector.shape_cast %173 : vector<2x32xf32> to vector<2x1x32xf32>
    tpu.vector_store %arg6[%c0_43, %c5, %c0_44], %176 {strides = array<i32>} : memref<2x8x32xf32, #tpu.memory_space<vmem>>, vector<2x1x32xf32>,
    %177 = vector.extract_strided_slice %30 {offsets = [0, 6, 0], sizes = [2, 1, 128], strides = [1, 1, 1]} : vector<2x8x128xf32> to vector<2x1x128xf32>
    %178 = vector.shape_cast %177 : vector<2x1x128xf32> to vector<2x128xf32>
    %179 = arith.truncf %173 : vector<2x32xf32> to vector<2x32xbf16>
    %cst_45 = arith.constant dense<0.000000e+00> : vector<2x128xf32>
    %180 = tpu.matmul %179, %24, %cst_45 {dimension_numbers = #tpu.dot_dimension_numbers<[1], [0], [0], [1], [0, 0, 1, 1], [], []>} : vector<2x32xbf16>, vector<32x128xbf16>, vector<2x128xf32> -> vector<2x128xf32>
    %181 = arith.addf %178, %180 : vector<2x128xf32>
    %182 = vector.extract_strided_slice %181 {offsets = [0, 0], sizes = [2, 96], strides = [1, 1]} : vector<2x128xf32> to vector<2x96xf32>
    %183 = arith.negf %182 : vector<2x96xf32>
    %184 = math.exp %183 : vector<2x96xf32>
    %cst_46 = arith.constant 1.000000e+00 : f32
    %185 = vector.broadcast %cst_46 : f32 to vector<2x96xf32>
    %186 = arith.addf %185, %184 : vector<2x96xf32>
    %187 = arith.divf %185, %186 : vector<2x96xf32>
    %188 = vector.extract_strided_slice %181 {offsets = [0, 96], sizes = [2, 32], strides = [1, 1]} : vector<2x128xf32> to vector<2x32xf32>
    %189 = math.tanh %188 : vector<2x32xf32>
    %190 = vector.extract_strided_slice %187 {offsets = [0, 32], sizes = [2, 32], strides = [1, 1]} : vector<2x96xf32> to vector<2x32xf32>
    %191 = arith.mulf %190, %170 : vector<2x32xf32>
    %192 = vector.extract_strided_slice %187 {offsets = [0, 0], sizes = [2, 32], strides = [1, 1]} : vector<2x96xf32> to vector<2x32xf32>
    %193 = arith.mulf %192, %189 : vector<2x32xf32>
    %194 = arith.addf %191, %193 : vector<2x32xf32>
    %195 = vector.extract_strided_slice %187 {offsets = [0, 64], sizes = [2, 32], strides = [1, 1]} : vector<2x96xf32> to vector<2x32xf32>
    %196 = math.tanh %194 : vector<2x32xf32>
    %197 = arith.mulf %195, %196 : vector<2x32xf32>
    %c0_47 = arith.constant 0 : index
    %c6 = arith.constant 6 : index
    %c0_48 = arith.constant 0 : index
    %198 = vector.load %arg6[%c0_47, %c6, %c0_48] : memref<2x8x32xf32, #tpu.memory_space<vmem>>, vector<2x1x32xf32>
    %199 = vector.shape_cast %198 : vector<2x1x32xf32> to vector<2x32xf32>
    %200 = vector.shape_cast %197 : vector<2x32xf32> to vector<2x1x32xf32>
    tpu.vector_store %arg6[%c0_47, %c6, %c0_48], %200 {strides = array<i32>} : memref<2x8x32xf32, #tpu.memory_space<vmem>>, vector<2x1x32xf32>,
    %201 = vector.extract_strided_slice %30 {offsets = [0, 7, 0], sizes = [2, 1, 128], strides = [1, 1, 1]} : vector<2x8x128xf32> to vector<2x1x128xf32>
    %202 = vector.shape_cast %201 : vector<2x1x128xf32> to vector<2x128xf32>
    %203 = arith.truncf %197 : vector<2x32xf32> to vector<2x32xbf16>
    %cst_49 = arith.constant dense<0.000000e+00> : vector<2x128xf32>
    %204 = tpu.matmul %203, %24, %cst_49 {dimension_numbers = #tpu.dot_dimension_numbers<[1], [0], [0], [1], [0, 0, 1, 1], [], []>} : vector<2x32xbf16>, vector<32x128xbf16>, vector<2x128xf32> -> vector<2x128xf32>
    %205 = arith.addf %202, %204 : vector<2x128xf32>
    %206 = vector.extract_strided_slice %205 {offsets = [0, 0], sizes = [2, 96], strides = [1, 1]} : vector<2x128xf32> to vector<2x96xf32>
    %207 = arith.negf %206 : vector<2x96xf32>
    %208 = math.exp %207 : vector<2x96xf32>
    %cst_50 = arith.constant 1.000000e+00 : f32
    %209 = vector.broadcast %cst_50 : f32 to vector<2x96xf32>
    %210 = arith.addf %209, %208 : vector<2x96xf32>
    %211 = arith.divf %209, %210 : vector<2x96xf32>
    %212 = vector.extract_strided_slice %205 {offsets = [0, 96], sizes = [2, 32], strides = [1, 1]} : vector<2x128xf32> to vector<2x32xf32>
    %213 = math.tanh %212 : vector<2x32xf32>
    %214 = vector.extract_strided_slice %211 {offsets = [0, 32], sizes = [2, 32], strides = [1, 1]} : vector<2x96xf32> to vector<2x32xf32>
    %215 = arith.mulf %214, %194 : vector<2x32xf32>
    %216 = vector.extract_strided_slice %211 {offsets = [0, 0], sizes = [2, 32], strides = [1, 1]} : vector<2x96xf32> to vector<2x32xf32>
    %217 = arith.mulf %216, %213 : vector<2x32xf32>
    %218 = arith.addf %215, %217 : vector<2x32xf32>
    %219 = vector.extract_strided_slice %211 {offsets = [0, 64], sizes = [2, 32], strides = [1, 1]} : vector<2x96xf32> to vector<2x32xf32>
    %220 = math.tanh %218 : vector<2x32xf32>
    %221 = arith.mulf %219, %220 : vector<2x32xf32>
    %c0_51 = arith.constant 0 : index
    %c7 = arith.constant 7 : index
    %c0_52 = arith.constant 0 : index
    %222 = vector.load %arg6[%c0_51, %c7, %c0_52] : memref<2x8x32xf32, #tpu.memory_space<vmem>>, vector<2x1x32xf32>
    %223 = vector.shape_cast %222 : vector<2x1x32xf32> to vector<2x32xf32>
    %224 = vector.shape_cast %221 : vector<2x32xf32> to vector<2x1x32xf32>
    tpu.vector_store %arg6[%c0_51, %c7, %c0_52], %224 {strides = array<i32>} : memref<2x8x32xf32, #tpu.memory_space<vmem>>, vector<2x1x32xf32>,
    %c0_53 = arith.constant 0 : index
    %c0_54 = arith.constant 0 : index
    %c0_55 = arith.constant 0 : index
    %225 = vector.load %arg6[%c0_53, %c0_54, %c0_55] : memref<2x8x32xf32, #tpu.memory_space<vmem>>, vector<2x8x32xf32>
    %c128 = arith.constant 128 : index
    %c0_56 = arith.constant 0 : index
    %226 = vector.load %arg3[%c128, %c0_56] : memref<416x128xbf16, #tpu.memory_space<vmem>>, vector<48x32xbf16>
    %c176 = arith.constant 176 : index
    %c0_57 = arith.constant 0 : index
    %227 = vector.load %arg3[%c176, %c0_57] : memref<416x128xbf16, #tpu.memory_space<vmem>>, vector<40x32xbf16>
    %228 = vector.shape_cast %3 : vector<2x16x48xf32> to vector<32x48xf32>
    %229 = arith.truncf %228 : vector<32x48xf32> to vector<32x48xbf16>
    %cst_58 = arith.constant dense<0.000000e+00> : vector<32x32xf32>
    %230 = tpu.matmul %229, %226, %cst_58 {dimension_numbers = #tpu.dot_dimension_numbers<[1], [0], [0], [1], [0, 0, 1, 1], [], []>} : vector<32x48xbf16>, vector<48x32xbf16>, vector<32x32xf32> -> vector<32x32xf32>
    %c1_59 = arith.constant 1 : index
    %c0_60 = arith.constant 0 : index
    %231 = vector.load %arg4[%c1_59, %c0_60] : memref<12x128xf32, #tpu.memory_space<vmem>>, vector<1x32xf32>
    %232 = vector.broadcast %231 : vector<1x32xf32> to vector<32x32xf32>
    %233 = arith.addf %230, %232 : vector<32x32xf32>
    %234 = vector.shape_cast %233 : vector<32x32xf32> to vector<2x16x32xf32>
    %235 = vector.shape_cast %4 : vector<2x8x40xf32> to vector<16x40xf32>
    %236 = arith.truncf %235 : vector<16x40xf32> to vector<16x40xbf16>
    %cst_61 = arith.constant dense<0.000000e+00> : vector<16x32xf32>
    %237 = tpu.matmul %236, %227, %cst_61 {dimension_numbers = #tpu.dot_dimension_numbers<[1], [0], [0], [1], [0, 0, 1, 1], [], []>} : vector<16x40xbf16>, vector<40x32xbf16>, vector<16x32xf32> -> vector<16x32xf32>
    %c2_62 = arith.constant 2 : index
    %c0_63 = arith.constant 0 : index
    %238 = vector.load %arg4[%c2_62, %c0_63] : memref<12x128xf32, #tpu.memory_space<vmem>>, vector<1x32xf32>
    %239 = vector.broadcast %238 : vector<1x32xf32> to vector<16x32xf32>
    %240 = arith.addf %237, %239 : vector<16x32xf32>
    %241 = vector.shape_cast %240 : vector<16x32xf32> to vector<2x8x32xf32>
    %242 = tpu.concatenate %234, %241 in 1 : vector<2x16x32xf32>, vector<2x8x32xf32> -> vector<2x24x32xf32>
    %c224 = arith.constant 224 : index
    %c0_64 = arith.constant 0 : index
    %243 = vector.load %arg3[%c224, %c0_64] : memref<416x128xbf16, #tpu.memory_space<vmem>>, vector<32x64xbf16>
    %244 = vector.shape_cast %225 : vector<2x8x32xf32> to vector<16x32xf32>
    %245 = arith.truncf %244 : vector<16x32xf32> to vector<16x32xbf16>
    %cst_65 = arith.constant dense<0.000000e+00> : vector<16x64xf32>
    %246 = tpu.matmul %245, %243, %cst_65 {dimension_numbers = #tpu.dot_dimension_numbers<[1], [0], [0], [1], [0, 0, 1, 1], [], []>} : vector<16x32xbf16>, vector<32x64xbf16>, vector<16x64xf32> -> vector<16x64xf32>
    %c3_66 = arith.constant 3 : index
    %c0_67 = arith.constant 0 : index
    %247 = vector.load %arg4[%c3_66, %c0_67] : memref<12x128xf32, #tpu.memory_space<vmem>>, vector<1x64xf32>
    %248 = vector.broadcast %247 : vector<1x64xf32> to vector<16x64xf32>
    %249 = arith.addf %246, %248 : vector<16x64xf32>
    %cst_68 = arith.constant 0.000000e+00 : f32
    %250 = vector.broadcast %cst_68 : f32 to vector<16x64xf32>
    %251 = arith.maximumf %249, %250 : vector<16x64xf32>
    %252 = vector.shape_cast %251 : vector<16x64xf32> to vector<2x8x64xf32>
    %c5_69 = arith.constant 5 : index
    %c0_70 = arith.constant 0 : index
    %253 = vector.load %arg4[%c5_69, %c0_70] : memref<12x128xf32, #tpu.memory_space<vmem>>, vector<1x64xf32>
    %c7_71 = arith.constant 7 : index
    %c0_72 = arith.constant 0 : index
    %254 = vector.load %arg4[%c7_71, %c0_72] : memref<12x128xf32, #tpu.memory_space<vmem>>, vector<1x1xf32>
    %255 = vector.shape_cast %253 : vector<1x64xf32> to vector<1x1x64xf32>
    %256 = vector.broadcast %255 : vector<1x1x64xf32> to vector<2x8x64xf32>
    %257 = arith.mulf %252, %256 : vector<2x8x64xf32>
    %cst_73 = arith.constant dense<0.000000e+00> : vector<2x8xf32>
    %258 = vector.multi_reduction <add>, %257, %cst_73 [2] : vector<2x8x64xf32> to vector<2x8xf32>
    %259 = vector.shape_cast %258 : vector<2x8xf32> to vector<2x8x1xf32>
    %260 = vector.shape_cast %254 : vector<1x1xf32> to vector<1x1x1xf32>
    %261 = vector.broadcast %260 : vector<1x1x1xf32> to vector<2x8x1xf32>
    %262 = arith.addf %259, %261 : vector<2x8x1xf32>
    %cst_74 = arith.constant -1.000000e+09 : f32
    %263 = vector.broadcast %cst_74 : f32 to vector<2x8x1xf32>
    %264 = arith.select %2, %263, %262 : vector<2x8x1xi1>, vector<2x8x1xf32>
    %cst_75 = arith.constant dense<0xFF800000> : vector<2x1xf32>
    %265 = vector.multi_reduction <maximumf>, %264, %cst_75 [1] : vector<2x8x1xf32> to vector<2x1xf32>
    %266 = vector.shape_cast %265 : vector<2x1xf32> to vector<2x1x1xf32>
    %267 = vector.broadcast %266 : vector<2x1x1xf32> to vector<2x8x1xf32>
    %268 = arith.subf %264, %267 : vector<2x8x1xf32>
    %269 = math.exp %268 : vector<2x8x1xf32>
    %cst_76 = arith.constant dense<0.000000e+00> : vector<2x1xf32>
    %270 = vector.multi_reduction <add>, %269, %cst_76 [1] : vector<2x8x1xf32> to vector<2x1xf32>
    %271 = vector.shape_cast %270 : vector<2x1xf32> to vector<2x1x1xf32>
    %272 = vector.broadcast %271 : vector<2x1x1xf32> to vector<2x8x1xf32>
    %273 = arith.divf %269, %272 : vector<2x8x1xf32>
    %274 = vector.broadcast %273 : vector<2x8x1xf32> to vector<2x8x32xf32>
    %275 = arith.mulf %274, %225 : vector<2x8x32xf32>
    %cst_77 = arith.constant dense<0.000000e+00> : vector<2x32xf32>
    %276 = vector.multi_reduction <add>, %275, %cst_77 [1] : vector<2x8x32xf32> to vector<2x32xf32>
    %c256 = arith.constant 256 : index
    %c0_78 = arith.constant 0 : index
    %277 = vector.load %arg3[%c256, %c0_78] : memref<416x128xbf16, #tpu.memory_space<vmem>>, vector<32x64xbf16>
    %278 = vector.shape_cast %242 : vector<2x24x32xf32> to vector<48x32xf32>
    %279 = arith.truncf %278 : vector<48x32xf32> to vector<48x32xbf16>
    %cst_79 = arith.constant dense<0.000000e+00> : vector<48x64xf32>
    %280 = tpu.matmul %279, %277, %cst_79 {dimension_numbers = #tpu.dot_dimension_numbers<[1], [0], [0], [1], [0, 0, 1, 1], [], []>} : vector<48x32xbf16>, vector<32x64xbf16>, vector<48x64xf32> -> vector<48x64xf32>
    %c4_80 = arith.constant 4 : index
    %c0_81 = arith.constant 0 : index
    %281 = vector.load %arg4[%c4_80, %c0_81] : memref<12x128xf32, #tpu.memory_space<vmem>>, vector<1x64xf32>
    %282 = vector.broadcast %281 : vector<1x64xf32> to vector<48x64xf32>
    %283 = arith.addf %280, %282 : vector<48x64xf32>
    %cst_82 = arith.constant 0.000000e+00 : f32
    %284 = vector.broadcast %cst_82 : f32 to vector<48x64xf32>
    %285 = arith.maximumf %283, %284 : vector<48x64xf32>
    %286 = vector.shape_cast %285 : vector<48x64xf32> to vector<2x24x64xf32>
    %c6_83 = arith.constant 6 : index
    %c0_84 = arith.constant 0 : index
    %287 = vector.load %arg4[%c6_83, %c0_84] : memref<12x128xf32, #tpu.memory_space<vmem>>, vector<1x64xf32>
    %c7_85 = arith.constant 7 : index
    %c1_86 = arith.constant 1 : index
    %288 = vector.load %arg4[%c7_85, %c1_86] : memref<12x128xf32, #tpu.memory_space<vmem>>, vector<1x1xf32>
    %289 = vector.shape_cast %287 : vector<1x64xf32> to vector<1x1x64xf32>
    %290 = vector.broadcast %289 : vector<1x1x64xf32> to vector<2x24x64xf32>
    %291 = arith.mulf %286, %290 : vector<2x24x64xf32>
    %cst_87 = arith.constant dense<0.000000e+00> : vector<2x24xf32>
    %292 = vector.multi_reduction <add>, %291, %cst_87 [2] : vector<2x24x64xf32> to vector<2x24xf32>
    %293 = vector.shape_cast %292 : vector<2x24xf32> to vector<2x24x1xf32>
    %294 = vector.shape_cast %288 : vector<1x1xf32> to vector<1x1x1xf32>
    %295 = vector.broadcast %294 : vector<1x1x1xf32> to vector<2x24x1xf32>
    %296 = arith.addf %293, %295 : vector<2x24x1xf32>
    %cst_88 = arith.constant -1.000000e+09 : f32
    %297 = vector.broadcast %cst_88 : f32 to vector<2x24x1xf32>
    %298 = arith.select %13, %297, %296 : vector<2x24x1xi1>, vector<2x24x1xf32>
    %cst_89 = arith.constant dense<0xFF800000> : vector<2x1xf32>
    %299 = vector.multi_reduction <maximumf>, %298, %cst_89 [1] : vector<2x24x1xf32> to vector<2x1xf32>
    %300 = vector.shape_cast %299 : vector<2x1xf32> to vector<2x1x1xf32>
    %301 = vector.broadcast %300 : vector<2x1x1xf32> to vector<2x24x1xf32>
    %302 = arith.subf %298, %301 : vector<2x24x1xf32>
    %303 = math.exp %302 : vector<2x24x1xf32>
    %cst_90 = arith.constant dense<0.000000e+00> : vector<2x1xf32>
    %304 = vector.multi_reduction <add>, %303, %cst_90 [1] : vector<2x24x1xf32> to vector<2x1xf32>
    %305 = vector.shape_cast %304 : vector<2x1xf32> to vector<2x1x1xf32>
    %306 = vector.broadcast %305 : vector<2x1x1xf32> to vector<2x24x1xf32>
    %307 = arith.divf %303, %306 : vector<2x24x1xf32>
    %308 = vector.broadcast %307 : vector<2x24x1xf32> to vector<2x24x32xf32>
    %309 = arith.mulf %308, %242 : vector<2x24x32xf32>
    %cst_91 = arith.constant dense<0.000000e+00> : vector<2x32xf32>
    %310 = vector.multi_reduction <add>, %309, %cst_91 [1] : vector<2x24x32xf32> to vector<2x32xf32>
    %311 = tpu.concatenate %276, %310 in 1 : vector<2x32xf32>, vector<2x32xf32> -> vector<2x64xf32>
    %c288 = arith.constant 288 : index
    %c0_92 = arith.constant 0 : index
    %312 = vector.load %arg3[%c288, %c0_92] : memref<416x128xbf16, #tpu.memory_space<vmem>>, vector<64x64xbf16>
    %313 = arith.truncf %311 : vector<2x64xf32> to vector<2x64xbf16>
    %cst_93 = arith.constant dense<0.000000e+00> : vector<2x64xf32>
    %314 = tpu.matmul %313, %312, %cst_93 {dimension_numbers = #tpu.dot_dimension_numbers<[1], [0], [0], [1], [0, 0, 1, 1], [], []>} : vector<2x64xbf16>, vector<64x64xbf16>, vector<2x64xf32> -> vector<2x64xf32>
    %c8 = arith.constant 8 : index
    %c0_94 = arith.constant 0 : index
    %315 = vector.load %arg4[%c8, %c0_94] : memref<12x128xf32, #tpu.memory_space<vmem>>, vector<1x64xf32>
    %316 = vector.broadcast %315 : vector<1x64xf32> to vector<2x64xf32>
    %317 = arith.addf %314, %316 : vector<2x64xf32>
    %cst_95 = arith.constant dense<0.000000e+00> : vector<2xf32>
    %318 = vector.multi_reduction <add>, %317, %cst_95 [1] : vector<2x64xf32> to vector<2xf32>
    %319 = vector.shape_cast %318 : vector<2xf32> to vector<2x1xf32>
    %cst_96 = arith.constant 6.400000e+01 : f32
    %320 = vector.broadcast %cst_96 : f32 to vector<2x1xf32>
    %321 = arith.divf %319, %320 : vector<2x1xf32>
    %322 = vector.broadcast %321 : vector<2x1xf32> to vector<2x64xf32>
    %323 = arith.subf %317, %322 : vector<2x64xf32>
    %324 = arith.mulf %323, %323 : vector<2x64xf32>
    %cst_97 = arith.constant dense<0.000000e+00> : vector<2xf32>
    %325 = vector.multi_reduction <add>, %324, %cst_97 [1] : vector<2x64xf32> to vector<2xf32>
    %326 = vector.shape_cast %325 : vector<2xf32> to vector<2x1xf32>
    %cst_98 = arith.constant 6.300000e+01 : f32
    %327 = vector.broadcast %cst_98 : f32 to vector<2x1xf32>
    %328 = arith.divf %326, %327 : vector<2x1xf32>
    %329 = math.sqrt %328 : vector<2x1xf32>
    %c9 = arith.constant 9 : index
    %c0_99 = arith.constant 0 : index
    %330 = vector.load %arg4[%c9, %c0_99] : memref<12x128xf32, #tpu.memory_space<vmem>>, vector<1x64xf32>
    %331 = vector.broadcast %330 : vector<1x64xf32> to vector<2x64xf32>
    %332 = arith.mulf %331, %323 : vector<2x64xf32>
    %cst_100 = arith.constant 9.99999997E-7 : f32
    %333 = vector.broadcast %cst_100 : f32 to vector<2x1xf32>
    %334 = arith.addf %329, %333 : vector<2x1xf32>
    %335 = vector.broadcast %334 : vector<2x1xf32> to vector<2x64xf32>
    %336 = arith.divf %332, %335 : vector<2x64xf32>
    %c10 = arith.constant 10 : index
    %c0_101 = arith.constant 0 : index
    %337 = vector.load %arg4[%c10, %c0_101] : memref<12x128xf32, #tpu.memory_space<vmem>>, vector<1x64xf32>
    %338 = vector.broadcast %337 : vector<1x64xf32> to vector<2x64xf32>
    %339 = arith.addf %336, %338 : vector<2x64xf32>
    %c352 = arith.constant 352 : index
    %c0_102 = arith.constant 0 : index
    %340 = vector.load %arg3[%c352, %c0_102] : memref<416x128xbf16, #tpu.memory_space<vmem>>, vector<64x10xbf16>
    %341 = arith.truncf %339 : vector<2x64xf32> to vector<2x64xbf16>
    %cst_103 = arith.constant dense<0.000000e+00> : vector<2x10xf32>
    %342 = tpu.matmul %341, %340, %cst_103 {dimension_numbers = #tpu.dot_dimension_numbers<[1], [0], [0], [1], [0, 0, 1, 1], [], []>} : vector<2x64xbf16>, vector<64x10xbf16>, vector<2x10xf32> -> vector<2x10xf32>
    %c11 = arith.constant 11 : index
    %c0_104 = arith.constant 0 : index
    %343 = vector.load %arg4[%c11, %c0_104] : memref<12x128xf32, #tpu.memory_space<vmem>>, vector<1x10xf32>
    %344 = vector.broadcast %343 : vector<1x10xf32> to vector<2x10xf32>
    %345 = arith.addf %342, %344 : vector<2x10xf32>
    %346 = arith.negf %345 : vector<2x10xf32>
    %347 = math.exp %346 : vector<2x10xf32>
    %cst_105 = arith.constant 1.000000e+00 : f32
    %348 = vector.broadcast %cst_105 : f32 to vector<2x10xf32>
    %349 = arith.addf %348, %347 : vector<2x10xf32>
    %350 = arith.divf %348, %349 : vector<2x10xf32>
    %c0_106 = arith.constant 0 : index
    %c0_107 = arith.constant 0 : index
    %351 = vector.load %arg5[%c0_106, %c0_107] : memref<2x10xf32, #tpu.memory_space<vmem>>, vector<2x10xf32>
    tpu.vector_store %arg5[%c0_106, %c0_107], %350 {strides = array<i32>} : memref<2x10xf32, #tpu.memory_space<vmem>>, vector<2x10xf32>,
    return
  }
}

</mosaic_0001>

<llo_original>
// kernel: net4_forward.1
$region0: #{net4_forward.1}
  #allocation0 [shape = 'u32[]', space=smem, size = 0x4, offset = 0x4, fixed_abs, tag = 'smem constant byte address 0x4 - core index']
  #allocation1 [shape = 'u32[144,128]{1,0:T(1,128)}', space=vmem, size = 0x12000, scoped, tag = 'internal scratch']
  #allocation2 [shape = 'f32[2,8,32]{2,1,0:T(8,128)}', space=vmem, size = 0x2000, scoped, tag = 'scratch operand']
  %s0 = inlined_call_operand.vmem [shape: s32[2,8,1], index: 0, kind: input, shape index: {}]
  %s1 = inlined_call_operand.hbm [shape: f32[2,16,48], index: 1, kind: input, shape index: {}]
  %s2 = inlined_call_operand.vmem [shape: f32[2,8,40], index: 2, kind: input, shape index: {}]
  %s3 = inlined_call_operand.hbm [shape: bf16[416,128], index: 3, kind: input, shape index: {}]
  %s4 = inlined_call_operand.vmem [shape: f32[12,128], index: 4, kind: input, shape index: {}]
  %s5 = inlined_call_operand.hbm [shape: f32[2,10], index: 5, kind: output, shape index: {}]
  %s6 = sld [smem:[#allocation0]]
  $region38: #{net4_forward.1} parent=0
    _
  %s8 = ssub.s32 1, %s6
  %s9 = scalar_select 0, %s8, %s6
  $region1: #{net4_forward.1} parent=0
    #allocation3 [shape = 'u8[16384]{0}', space=vmem, size = 0x4000, scoped, tag = 'input window, operand 1, single buffered']
    #allocation4 [shape = 's32[1]{0}', space=sflag, size = 0x4, scoped, tag = 'scoped memory for net4_forward.1']
    #allocation5 [shape = 's32[1]{0}', space=sflag, size = 0x4, scoped, tag = 'scoped memory for net4_forward.1']
    #allocation6 [shape = 'u8[106496]{0}', space=vmem, size = 0x1a000, scoped, tag = 'input window, operand 3, single buffered']
    #allocation7 [shape = 's32[1]{0}', space=sflag, size = 0x4, scoped, tag = 'scoped memory for net4_forward.1']
    #allocation8 [shape = 'u8[1024]{0}', space=vmem, size = 0x400, scoped, tag = 'output window, operand 0, single buffered']
    %10 = vsyncpa [#allocation4], 0
    %11 = vsyncpa [#allocation7], 0
    %12 = vsyncpa [#allocation5], 0
    // Predicated region
    $region2: #{net4_forward.1} parent=1 // pred_check
      _
    $region3: #{net4_forward.1} parent=1 // pred_check_branch
      %14 = sbr.rel (0) target = $region5
    $region4: #{net4_forward.1} parent=1 // pred_region
      _
    $region5: #{net4_forward.1} parent=1 // pred_fallthru
      _
    // Predicated region
    $region6: #{net4_forward.1} parent=1 // pred_check
      _
    $region7: #{net4_forward.1} parent=1 // pred_check_branch
      %16 = sbr.rel (0) target = $region9
    $region8: #{net4_forward.1} parent=1 // pred_region
      %s18 = ssub.s32 512, 512
      %19 = vsyncadd [#allocation4], %s18
      %s20 = sshll.u32 [#allocation3], 4
      %s21 = int_to_ptr.vmem [resolvable:$true] %s20
      %26 = dma.hbm_to_vmem [thread:$0]  %s1, 512, %s21, [#allocation4], 128, 128, 8
    $region9: #{net4_forward.1} parent=1 // pred_fallthru
      _
    // Predicated region
    $region10: #{net4_forward.1} parent=1 // pred_check
      _
    $region11: #{net4_forward.1} parent=1 // pred_check_branch
      %28 = sbr.rel (0) target = $region13
    $region12: #{net4_forward.1} parent=1 // pred_region
      _
    $region13: #{net4_forward.1} parent=1 // pred_fallthru
      _
    // Predicated region
    $region14: #{net4_forward.1} parent=1 // pred_check
      _
    $region15: #{net4_forward.1} parent=1 // pred_check_branch
      %30 = sbr.rel (0) target = $region17
    $region16: #{net4_forward.1} parent=1 // pred_region
      %s32 = ssub.s32 3328, 3328
      %33 = vsyncadd [#allocation7], %s32
      %s34 = sshll.u32 [#allocation6], 4
      %s35 = int_to_ptr.vmem [resolvable:$true] %s34
      %40 = dma.hbm_to_vmem [thread:$0]  %s3, 3328, %s35, [#allocation7], 64, 64, 4
    $region17: #{net4_forward.1} parent=1 // pred_fallthru
      _
    // Predicated region
    $region18: #{net4_forward.1} parent=1 // pred_check
      _
    $region19: #{net4_forward.1} parent=1 // pred_check_branch
      %42 = sbr.rel (0) target = $region21
    $region20: #{net4_forward.1} parent=1 // pred_region
      _
    $region21: #{net4_forward.1} parent=1 // pred_fallthru
      _
    // Predicated region
    $region22: #{net4_forward.1} parent=1 // pred_check
      _
    $region23: #{net4_forward.1} parent=1 // pred_check_branch
      %44 = sbr.rel (0) target = $region25
    $region24: #{net4_forward.1} parent=1 // pred_region
      %45 = dma.done [#allocation4], 512
    $region25: #{net4_forward.1} parent=1 // pred_fallthru
      _
    // Predicated region
    $region26: #{net4_forward.1} parent=1 // pred_check
      _
    $region27: #{net4_forward.1} parent=1 // pred_check_branch
      %47 = sbr.rel (0) target = $region29
    $region28: #{net4_forward.1} parent=1 // pred_region
      %48 = dma.done [#allocation7], 3328
    $region29: #{net4_forward.1} parent=1 // pred_fallthru
      _
    %v50 = vld [vmem:[%s0] sm:$0xff]
    %v51 = vld [vmem:[%s0 + $0x8] sm:$0xff]
    %vm52 = vcmp.eq.s32.totalorder %v50, 0
    %vm53 = vcmp.eq.s32.totalorder %v51, 0
    %v54 = vld [vmem:[#allocation3] sm:$0xff]
    %v55 = vld [vmem:[#allocation3 + $0x8] sm:$0xff]
    %v56 = vld [vmem:[#allocation3 + $0x10] sm:$0xff]
    %v57 = vld [vmem:[#allocation3 + $0x18] sm:$0xff]
    %v58 = vld [vmem:[%s2] sm:$0xff]
    %v59 = vld [vmem:[%s2 + $0x8] sm:$0xff]
    %v60 = vand.u32 2147483647, %v54
    %v61 = vand.u32 2147483647, %v55
    %v62 = vand.u32 2147483647, %v56
    %v63 = vand.u32 2147483647, %v57
    %vm64 = vcmask 392192
    %v65 = vsel %vm64, %v60, 0.0
    %66 = vadd.xlane.f32.xlu0 %v65
    %v67 = vpop.xlane.xlu0 %66
    %v68 = vsel %vm64, %v61, 0.0
    %69 = vadd.xlane.f32.xlu0 %v68
    %v70 = vpop.xlane.xlu0 %69
    %v71 = vsel %vm64, %v62, 0.0
    %72 = vadd.xlane.f32.xlu0 %v71
    %v73 = vpop.xlane.xlu0 %72
    %v74 = vsel %vm64, %v63, 0.0
    %75 = vadd.xlane.f32.xlu0 %v74
    %v76 = vpop.xlane.xlu0 %75
    %v77 = vand.u32 2147483647, %v58
    %v78 = vand.u32 2147483647, %v59
    %vm79 = vcmask 326656
    %v80 = vsel %vm79, %v77, 0.0
    %81 = vadd.xlane.f32.xlu0 %v80
    %v82 = vpop.xlane.xlu0 %81
    %v83 = vsel %vm79, %v78, 0.0
    %84 = vadd.xlane.f32.xlu0 %v83
    %v85 = vpop.xlane.xlu0 %84
    %vm86 = vcmp.eq.f32.partialorder %v67, 0.0
    %vm87 = vcmp.eq.f32.partialorder %v70, 0.0
    %vm88 = vcmp.eq.f32.partialorder %v82, 0.0
    %vm89 = vcmp.eq.f32.partialorder %v73, 0.0
    %vm90 = vcmp.eq.f32.partialorder %v76, 0.0
    %vm91 = vcmp.eq.f32.partialorder %v85, 0.0
    %v92 = vlaneseq
    %v93 = vand.u32 %v92, 127
    %94 = vset.pattern.permute.xlu0 0
    %95 = vperm.xlu0 %94, %v50
    %v96 = vpop.permute.xlu0 %95
    %97 = vset.pattern.permute.xlu0 0
    %98 = vperm.xlu0 %97, %v51
    %v99 = vpop.permute.xlu0 %98
    %vm100 = vcmp.eq.s32.totalorder %v93, %v96
    %vm101 = vcmp.eq.s32.totalorder %v93, %v99
    %v102 = vsel %vm100, 1, 0
    %v103 = vsel %vm101, 1, 0
    %v104 = vcvt.s32.f32 %v102
    %v105 = vcvt.s32.f32 %v103
    %v106 = vld [vmem:[#allocation6] sm:$0xf]
    %v107 = vld [vmem:[#allocation6 + $0x4] sm:$0xf]
    %v108 = vld [vmem:[#allocation6 + $0x8] sm:$0xf]
    %v109 = vld [vmem:[#allocation6 + $0xc] sm:$0xf]
    %v110 = vld [vmem:[#allocation6 + $0x10] sm:$0xf]
    %v111 = vld [vmem:[#allocation6 + $0x14] sm:$0xf]
    %v112 = vld [vmem:[#allocation6 + $0x18] sm:$0xf]
    %v113 = vld [vmem:[#allocation6 + $0x1c] sm:$0xf]
    %v114 = vpack.c.bf16 %v105, %v104
    %v123 = vunpack.c.l.b16 %v106
    %v124 = vunpack.c.l.b16 %v107
    %v125 = vunpack.c.l.b16 %v108
    %v126 = vunpack.c.l.b16 %v109
    %v127 = vunpack.c.l.b16 %v110
    %v128 = vunpack.c.l.b16 %v111
    %v129 = vunpack.c.l.b16 %v112
    %v130 = vunpack.c.l.b16 %v113
    %v131 = vpack.c.b16 %v124, %v123
    %v132 = vpack.c.b16 %v126, %v125
    %v133 = vpack.c.b16 %v128, %v127
    %v134 = vpack.c.b16 %v130, %v129
    %vm139 = vcmask 523264
    %v141 = vsel %vm139, %v114, 0
    %143 = vmatprep.subr.bf16.mxu0 0
    %144 = vmatpush1.bf16.msra.mxu0 %v131
    %145 = vmatprep.subr.bf16.mxu0 0
    %146 = vmatpush1.bf16.msra.mxu0 %v132
    %147 = vmatprep.subr.bf16.mxu0 0
    %148 = vmatpush1.bf16.msra.mxu0 %v133
    %149 = vmatprep.subr.bf16.mxu0 0
    %150 = vmatpush1.bf16.msra.mxu0 %v134
    %151 = vmatprep.subr.bf16.mxu0 0
    %152 = vmatpush1.bf16.msra.mxu0 0
    %153 = vmatprep.subr.bf16.mxu0 0
    %154 = vmatpush1.bf16.msra.mxu0 0
    %155 = vmatprep.subr.bf16.mxu0 0
    %156 = vmatpush1.bf16.msra.mxu0 0
    %157 = vmatprep.subr.bf16.mxu0 0
    %158 = vmatpush1.bf16.msra.mxu0 0
    %159 = vmatprep.subr.bf16.mxu0 0
    %160 = vmatpush1.bf16.msra.mxu0 0
    %161 = vmatprep.subr.bf16.mxu0 0
    %162 = vmatpush1.bf16.msra.mxu0 0
    %163 = vmatprep.subr.bf16.mxu0 0
    %164 = vmatpush1.bf16.msra.mxu0 0
    %165 = vmatprep.subr.bf16.mxu0 0
    %166 = vmatpush1.bf16.msra.mxu0 0
    %167 = vmatprep.subr.bf16.mxu0 0
    %168 = vmatpush1.bf16.msra.mxu0 0
    %169 = vmatprep.subr.bf16.mxu0 0
    %170 = vmatpush1.bf16.msra.mxu0 0
    %171 = vmatprep.subr.bf16.mxu0 0
    %172 = vmatpush1.bf16.msra.mxu0 0
    %173 = vmatprep.subr.bf16.mxu0 0
    %174 = vmatpush1.bf16.msra.mxu0 0
    %175 = vmatprep.mubr.bf16.mxu0 0
    %176 = vmatmul.mubr.bf16.gmra.mrb[0].mxu0 %v141
    %v177 = vpop.f32.mrb[0].mxu0
    %v178 = vadd.f32 0.0, %v177
    %v179 = vpop.f32.mrb[0].mxu0
    %v180 = vpop.f32.mrb[0].mxu0
    %v181 = vadd.f32 0.0, %v180
    %v182 = vpop.f32.mrb[0].mxu0
    %183 = vdwg.mxu0
    %v184 = vld [vmem:[#allocation6 + $0x20] sm:$0xf]
    %v185 = vld [vmem:[#allocation6 + $0x24] sm:$0xf]
    %v186 = vld [vmem:[#allocation6 + $0x28] sm:$0xf]
    %v187 = vld [vmem:[#allocation6 + $0x2c] sm:$0xf]
    %v188 = vld [vmem:[#allocation6 + $0x30] sm:$0xf]
    %v189 = vld [vmem:[#allocation6 + $0x34] sm:$0xf]
    %v190 = vld [vmem:[#allocation6 + $0x38] sm:$0xf]
    %v191 = vld [vmem:[#allocation6 + $0x3c] sm:$0xf]
    %v192 = vpack.c.bf16 %v181, %v178
    %v193 = vld [vmem:[%s4] sm:$0x1]
    %v194 = vlaneseq
    %v195 = vshrl.u32 %v194, 7
    %v196 = vsub.s32 0, %v195
    %v197 = vrot.slane %v193, %v196
    %v202 = vunpack.c.l.b16 %v184
    %v203 = vunpack.c.l.b16 %v185
    %v204 = vunpack.c.l.b16 %v186
    %v205 = vunpack.c.l.b16 %v187
    %v206 = vpack.c.b16 %v203, %v202
    %v207 = vpack.c.b16 %v205, %v204
    %vm210 = vcmask 261120
    %v212 = vsel %vm210, %v192, 0
    %214 = vmatprep.subr.bf16.mxu0 0
    %215 = vmatpush1.bf16.msra.mxu0 %v206
    %216 = vmatprep.subr.bf16.mxu0 0
    %217 = vmatpush1.bf16.msra.mxu0 %v207
    %218 = vmatprep.subr.bf16.mxu0 0
    %219 = vmatpush1.bf16.msra.mxu0 0
    %220 = vmatprep.subr.bf16.mxu0 0
    %221 = vmatpush1.bf16.msra.mxu0 0
    %222 = vmatprep.subr.bf16.mxu0 0
    %223 = vmatpush1.bf16.msra.mxu0 0
    %224 = vmatprep.subr.bf16.mxu0 0
    %225 = vmatpush1.bf16.msra.mxu0 0
    %226 = vmatprep.subr.bf16.mxu0 0
    %227 = vmatpush1.bf16.msra.mxu0 0
    %228 = vmatprep.subr.bf16.mxu0 0
    %229 = vmatpush1.bf16.msra.mxu0 0
    %230 = vmatprep.subr.bf16.mxu0 0
    %231 = vmatpush1.bf16.msra.mxu0 0
    %232 = vmatprep.subr.bf16.mxu0 0
    %233 = vmatpush1.bf16.msra.mxu0 0
    %234 = vmatprep.subr.bf16.mxu0 0
    %235 = vmatpush1.bf16.msra.mxu0 0
    %236 = vmatprep.subr.bf16.mxu0 0
    %237 = vmatpush1.bf16.msra.mxu0 0
    %238 = vmatprep.subr.bf16.mxu0 0
    %239 = vmatpush1.bf16.msra.mxu0 0
    %240 = vmatprep.subr.bf16.mxu0 0
    %241 = vmatpush1.bf16.msra.mxu0 0
    %242 = vmatprep.subr.bf16.mxu0 0
    %243 = vmatpush1.bf16.msra.mxu0 0
    %244 = vmatprep.subr.bf16.mxu0 0
    %245 = vmatpush1.bf16.msra.mxu0 0
    %246 = vmatprep.mubr.bf16.mxu0 0
    %247 = vmatmul.mubr.bf16.gmra.mrb[0].mxu0 %v212
    %v248 = vpop.f32.mrb[0].mxu0
    %v249 = vadd.f32 %v197, %v248
    %v250 = vpop.f32.mrb[0].mxu0
    %v251 = vpop.f32.mrb[0].mxu0
    %v252 = vadd.f32 %v197, %v251
    %v253 = vpop.f32.mrb[0].mxu0
    %254 = vdwg.mxu0
    %v259 = vunpack.c.l.b16 %v188
    %v260 = vunpack.c.l.b16 %v189
    %v261 = vunpack.c.l.b16 %v190
    %v262 = vunpack.c.l.b16 %v191
    %v263 = vpack.c.b16 %v260, %v259
    %v264 = vpack.c.b16 %v262, %v261
    %v268 = vsel %vm210, 0, 0
    %270 = vmatprep.subr.bf16.mxu0 0
    %271 = vmatpush1.bf16.msra.mxu0 %v263
    %272 = vmatprep.subr.bf16.mxu0 0
    %273 = vmatpush1.bf16.msra.mxu0 %v264
    %274 = vmatprep.subr.bf16.mxu0 0
    %275 = vmatpush1.bf16.msra.mxu0 0
    %276 = vmatprep.subr.bf16.mxu0 0
    %277 = vmatpush1.bf16.msra.mxu0 0
    %278 = vmatprep.subr.bf16.mxu0 0
    %279 = vmatpush1.bf16.msra.mxu0 0
    %280 = vmatprep.subr.bf16.mxu0 0
    %281 = vmatpush1.bf16.msra.mxu0 0
    %282 = vmatprep.subr.bf16.mxu0 0
    %283 = vmatpush1.bf16.msra.mxu0 0
    %284 = vmatprep.subr.bf16.mxu0 0
    %285 = vmatpush1.bf16.msra.mxu0 0
    %286 = vmatprep.subr.bf16.mxu0 0
    %287 = vmatpush1.bf16.msra.mxu0 0
    %288 = vmatprep.subr.bf16.mxu0 0
    %289 = vmatpush1.bf16.msra.mxu0 0
    %290 = vmatprep.subr.bf16.mxu0 0
    %291 = vmatpush1.bf16.msra.mxu0 0
    %292 = vmatprep.subr.bf16.mxu0 0
    %293 = vmatpush1.bf16.msra.mxu0 0
    %294 = vmatprep.subr.bf16.mxu0 0
    %295 = vmatpush1.bf16.msra.mxu0 0
    %296 = vmatprep.subr.bf16.mxu0 0
    %297 = vmatpush1.bf16.msra.mxu0 0
    %298 = vmatprep.subr.bf16.mxu0 0
    %299 = vmatpush1.bf16.msra.mxu0 0
    %300 = vmatprep.subr.bf16.mxu0 0
    %301 = vmatpush1.bf16.msra.mxu0 0
    %302 = vmatprep.mubr.bf16.mxu0 0
    %303 = vmatmul.mubr.bf16.gmra.mrb[0].mxu0 %v268
    %v304 = vpop.f32.mrb[0].mxu0
    %v305 = vadd.f32 0.0, %v304
    %v306 = vpop.f32.mrb[0].mxu0
    %v307 = vpop.f32.mrb[0].mxu0
    %v308 = vpop.f32.mrb[0].mxu0
    %309 = vdwg.mxu0
    %v311 = vrot.slane %v305, 1
    %v314 = vadd.f32 %v249, %v305
    %v315 = vadd.f32 %v252, %v311
    %v316 = vxor.u32 %v314, 2147483648
    %v317 = vxor.u32 %v315, 2147483648
    %v318 = vmul.f32 %v316, 1.442695
    %v319 = vpow.pop %v318
    %v320 = vmul.f32 %v317, 1.442695
    %v321 = vpow.pop %v320
    %v322 = vadd.f32 %v319, 1.0
    %v323 = vadd.f32 %v321, 1.0
    %v324 = vrcp.pop %v322
    %v325 = vmul.f32 1.0, %v324
    %v326 = vrcp.pop %v323
    %v327 = vmul.f32 1.0, %v326
    %v328 = vtanh.pop %v314
    %v329 = vtanh.pop %v315
    %v330 = vmul.f32 %v325, 0.0
    %v331 = vmul.f32 %v327, 0.0
    %334 = vrot.lane.b32.xlu0 %v328, 32
    %v335 = vpop.permute.xlu0 %334
    %336 = vrot.lane.b32.xlu0 %v329, 32
    %v337 = vpop.permute.xlu0 %336
    %v340 = vmul.f32 %v325, %v335
    %v341 = vmul.f32 %v327, %v337
    %344 = vrot.lane.b32.xlu0 %v340, 32
    %v345 = vpop.permute.xlu0 %344
    %346 = vrot.lane.b32.xlu0 %v341, 32
    %v347 = vpop.permute.xlu0 %346
    %v350 = vadd.f32 %v330, %v345
    %v351 = vadd.f32 %v331, %v347
    %v352 = vtanh.pop %v350
    %v353 = vtanh.pop %v351
    %356 = vrot.lane.b32.xlu0 %v352, 32
    %v357 = vpop.permute.xlu0 %356
    %358 = vrot.lane.b32.xlu0 %v353, 32
    %v359 = vpop.permute.xlu0 %358
    %v362 = vmul.f32 %v325, %v357
    %v363 = vmul.f32 %v327, %v359
    %366 = vrot.lane.b32.xlu0 %v362, 64
    %v367 = vpop.permute.xlu0 %366
    %368 = vrot.lane.b32.xlu0 %v363, 64
    %v369 = vpop.permute.xlu0 %368
    %vm372 = vcmask 253952
    %373 = vst.msk [vmem:[#allocation2] sm:$0x1] %vm372, %v367
    %374 = vst.msk [vmem:[#allocation2 + $0x8] sm:$0x1] %vm372, %v369
    %v375 = vpack.c.bf16 %v362, %v362
    %v376 = vpack.c.bf16 %v363, %v363
    %v379 = vunpack.c.l.b16 %v375
    %v380 = vunpack.c.l.b16 %v376
    %v381 = vrot.slane %v380, 7
    %vm382 = vcmask 1041409
    %v383 = vsel %vm382, %v381, %v379
    %v384 = vpack.c.b16 %v383, %v383
    %385 = vrot.lane.b32.xlu0 %v384, 64
    %v386 = vpop.permute.xlu0 %385
    %v388 = vsel %vm210, %v386, 0
    %390 = vmatprep.subr.bf16.mxu0 0
    %391 = vmatpush1.bf16.msra.mxu0 %v263
    %392 = vmatprep.subr.bf16.mxu0 0
    %393 = vmatpush1.bf16.msra.mxu0 %v264
    %394 = vmatprep.subr.bf16.mxu0 0
    %395 = vmatpush1.bf16.msra.mxu0 0
    %396 = vmatprep.subr.bf16.mxu0 0
    %397 = vmatpush1.bf16.msra.mxu0 0
    %398 = vmatprep.subr.bf16.mxu0 0
    %399 = vmatpush1.bf16.msra.mxu0 0
    %400 = vmatprep.subr.bf16.mxu0 0
    %401 = vmatpush1.bf16.msra.mxu0 0
    %402 = vmatprep.subr.bf16.mxu0 0
    %403 = vmatpush1.bf16.msra.mxu0 0
    %404 = vmatprep.subr.bf16.mxu0 0
    %405 = vmatpush1.bf16.msra.mxu0 0
    %406 = vmatprep.subr.bf16.mxu0 0
    %407 = vmatpush1.bf16.msra.mxu0 0
    %408 = vmatprep.subr.bf16.mxu0 0
    %409 = vmatpush1.bf16.msra.mxu0 0
    %410 = vmatprep.subr.bf16.mxu0 0
    %411 = vmatpush1.bf16.msra.mxu0 0
    %412 = vmatprep.subr.bf16.mxu0 0
    %413 = vmatpush1.bf16.msra.mxu0 0
    %414 = vmatprep.subr.bf16.mxu0 0
    %415 = vmatpush1.bf16.msra.mxu0 0
    %416 = vmatprep.subr.bf16.mxu0 0
    %417 = vmatpush1.bf16.msra.mxu0 0
    %418 = vmatprep.subr.bf16.mxu0 0
    %419 = vmatpush1.bf16.msra.mxu0 0
    %420 = vmatprep.subr.bf16.mxu0 0
    %421 = vmatpush1.bf16.msra.mxu0 0
    %422 = vmatprep.mubr.bf16.mxu0 0
    %423 = vmatmul.mubr.bf16.gmra.mrb[0].mxu0 %v388
    %v424 = vpop.f32.mrb[0].mxu0
    %v425 = vadd.f32 0.0, %v424
    %v426 = vpop.f32.mrb[0].mxu0
    %v427 = vpop.f32.mrb[0].mxu0
    %v428 = vpop.f32.mrb[0].mxu0
    %429 = vdwg.mxu0
    %v431 = vrot.slane %v425, 7
    %v434 = vadd.f32 %v249, %v431
    %v435 = vadd.f32 %v252, %v425
    %v436 = vxor.u32 %v434, 2147483648
    %v437 = vxor.u32 %v435, 2147483648
    %v438 = vmul.f32 %v436, 1.442695
    %v439 = vpow.pop %v438
    %v440 = vmul.f32 %v437, 1.442695
    %v441 = vpow.pop %v440
    %v442 = vadd.f32 %v439, 1.0
    %v443 = vadd.f32 %v441, 1.0
    %v444 = vrcp.pop %v442
    %v445 = vmul.f32 1.0, %v444
    %v446 = vrcp.pop %v443
    %v447 = vmul.f32 1.0, %v446
    %v448 = vtanh.pop %v434
    %v449 = vtanh.pop %v435
    %v452 = vrot.slane %v350, 7
    %v453 = vrot.slane %v351, 7
    %v456 = vmul.f32 %v445, %v452
    %v457 = vmul.f32 %v447, %v453
    %460 = vrot.lane.b32.xlu0 %v448, 32
    %v461 = vpop.permute.xlu0 %460
    %462 = vrot.lane.b32.xlu0 %v449, 32
    %v463 = vpop.permute.xlu0 %462
    %v466 = vmul.f32 %v445, %v461
    %v467 = vmul.f32 %v447, %v463
    %470 = vrot.lane.b32.xlu0 %v466, 32
    %v471 = vpop.permute.xlu0 %470
    %472 = vrot.lane.b32.xlu0 %v467, 32
    %v473 = vpop.permute.xlu0 %472
    %v476 = vadd.f32 %v456, %v471
    %v477 = vadd.f32 %v457, %v473
    %v478 = vtanh.pop %v476
    %v479 = vtanh.pop %v477
    %482 = vrot.lane.b32.xlu0 %v478, 32
    %v483 = vpop.permute.xlu0 %482
    %484 = vrot.lane.b32.xlu0 %v479, 32
    %v485 = vpop.permute.xlu0 %484
    %v488 = vmul.f32 %v445, %v483
    %v489 = vmul.f32 %v447, %v485
    %492 = vrot.lane.b32.xlu0 %v488, 64
    %v493 = vpop.permute.xlu0 %492
    %494 = vrot.lane.b32.xlu0 %v489, 64
    %v495 = vpop.permute.xlu0 %494
    %vm498 = vcmask 254977
    %499 = vst.msk [vmem:[#allocation2] sm:$0x2] %vm498, %v493
    %500 = vst.msk [vmem:[#allocation2 + $0x8] sm:$0x2] %vm498, %v495
    %v501 = vpack.c.bf16 %v488, %v488
    %v502 = vpack.c.bf16 %v489, %v489
    %v505 = vunpack.c.l.b16 %v501
    %v506 = vunpack.c.l.b16 %v502
    %v507 = vrot.slane %v505, 1
    %v508 = vsel %vm382, %v506, %v507
    %v509 = vpack.c.b16 %v508, %v508
    %510 = vrot.lane.b32.xlu0 %v509, 64
    %v511 = vpop.permute.xlu0 %510
    %v513 = vsel %vm210, %v511, 0
    %515 = vmatprep.subr.bf16.mxu0 0
    %516 = vmatpush1.bf16.msra.mxu0 %v263
    %517 = vmatprep.subr.bf16.mxu0 0
    %518 = vmatpush1.bf16.msra.mxu0 %v264
    %519 = vmatprep.subr.bf16.mxu0 0
    %520 = vmatpush1.bf16.msra.mxu0 0
    %521 = vmatprep.subr.bf16.mxu0 0
    %522 = vmatpush1.bf16.msra.mxu0 0
    %523 = vmatprep.subr.bf16.mxu0 0
    %524 = vmatpush1.bf16.msra.mxu0 0
    %525 = vmatprep.subr.bf16.mxu0 0
    %526 = vmatpush1.bf16.msra.mxu0 0
    %527 = vmatprep.subr.bf16.mxu0 0
    %528 = vmatpush1.bf16.msra.mxu0 0
    %529 = vmatprep.subr.bf16.mxu0 0
    %530 = vmatpush1.bf16.msra.mxu0 0
    %531 = vmatprep.subr.bf16.mxu0 0
    %532 = vmatpush1.bf16.msra.mxu0 0
    %533 = vmatprep.subr.bf16.mxu0 0
    %534 = vmatpush1.bf16.msra.mxu0 0
    %535 = vmatprep.subr.bf16.mxu0 0
    %536 = vmatpush1.bf16.msra.mxu0 0
    %537 = vmatprep.subr.bf16.mxu0 0
    %538 = vmatpush1.bf16.msra.mxu0 0
    %539 = vmatprep.subr.bf16.mxu0 0
    %540 = vmatpush1.bf16.msra.mxu0 0
    %541 = vmatprep.subr.bf16.mxu0 0
    %542 = vmatpush1.bf16.msra.mxu0 0
    %543 = vmatprep.subr.bf16.mxu0 0
    %544 = vmatpush1.bf16.msra.mxu0 0
    %545 = vmatprep.subr.bf16.mxu0 0
    %546 = vmatpush1.bf16.msra.mxu0 0
    %547 = vmatprep.mubr.bf16.mxu0 0
    %548 = vmatmul.mubr.bf16.gmra.mrb[0].mxu0 %v513
    %v549 = vpop.f32.mrb[0].mxu0
    %v550 = vadd.f32 0.0, %v549
    %v551 = vpop.f32.mrb[0].mxu0
    %v552 = vpop.f32.mrb[0].mxu0
    %v553 = vpop.f32.mrb[0].mxu0
    %554 = vdwg.mxu0
    %v556 = vrot.slane %v550, 6
    %v557 = vrot.slane %v550, 7
    %v560 = vadd.f32 %v249, %v556
    %v561 = vadd.f32 %v252, %v557
    %v562 = vxor.u32 %v560, 2147483648
    %v563 = vxor.u32 %v561, 2147483648
    %v564 = vmul.f32 %v562, 1.442695
    %v565 = vpow.pop %v564
    %v566 = vmul.f32 %v563, 1.442695
    %v567 = vpow.pop %v566
    %v568 = vadd.f32 %v565, 1.0
    %v569 = vadd.f32 %v567, 1.0
    %v570 = vrcp.pop %v568
    %v571 = vmul.f32 1.0, %v570
    %v572 = vrcp.pop %v569
    %v573 = vmul.f32 1.0, %v572
    %v574 = vtanh.pop %v560
    %v575 = vtanh.pop %v561
    %v578 = vrot.slane %v476, 7
    %v579 = vrot.slane %v477, 7
    %v582 = vmul.f32 %v571, %v578
    %v583 = vmul.f32 %v573, %v579
    %586 = vrot.lane.b32.xlu0 %v574, 32
    %v587 = vpop.permute.xlu0 %586
    %588 = vrot.lane.b32.xlu0 %v575, 32
    %v589 = vpop.permute.xlu0 %588
    %v592 = vmul.f32 %v571, %v587
    %v593 = vmul.f32 %v573, %v589
    %596 = vrot.lane.b32.xlu0 %v592, 32
    %v597 = vpop.permute.xlu0 %596
    %598 = vrot.lane.b32.xlu0 %v593, 32
    %v599 = vpop.permute.xlu0 %598
    %v602 = vadd.f32 %v582, %v597
    %v603 = vadd.f32 %v583, %v599
    %v604 = vtanh.pop %v602
    %v605 = vtanh.pop %v603
    %608 = vrot.lane.b32.xlu0 %v604, 32
    %v609 = vpop.permute.xlu0 %608
    %610 = vrot.lane.b32.xlu0 %v605, 32
    %v611 = vpop.permute.xlu0 %610
    %v614 = vmul.f32 %v571, %v609
    %v615 = vmul.f32 %v573, %v611
    %618 = vrot.lane.b32.xlu0 %v614, 64
    %v619 = vpop.permute.xlu0 %618
    %620 = vrot.lane.b32.xlu0 %v615, 64
    %v621 = vpop.permute.xlu0 %620
    %vm624 = vcmask 256002
    %625 = vst.msk [vmem:[#allocation2] sm:$0x4] %vm624, %v619
    %626 = vst.msk [vmem:[#allocation2 + $0x8] sm:$0x4] %vm624, %v621
    %v627 = vpack.c.bf16 %v614, %v614
    %v628 = vpack.c.bf16 %v615, %v615
    %v631 = vunpack.c.l.b16 %v627
    %v632 = vunpack.c.l.b16 %v628
    %v633 = vrot.slane %v631, 2
    %v634 = vrot.slane %v632, 1
    %v635 = vsel %vm382, %v634, %v633
    %v636 = vpack.c.b16 %v635, %v635
    %637 = vrot.lane.b32.xlu0 %v636, 64
    %v638 = vpop.permute.xlu0 %637
    %v640 = vsel %vm210, %v638, 0
    %642 = vmatprep.subr.bf16.mxu0 0
    %643 = vmatpush1.bf16.msra.mxu0 %v263
    %644 = vmatprep.subr.bf16.mxu0 0
    %645 = vmatpush1.bf16.msra.mxu0 %v264
    %646 = vmatprep.subr.bf16.mxu0 0
    %647 = vmatpush1.bf16.msra.mxu0 0
    %648 = vmatprep.subr.bf16.mxu0 0
    %649 = vmatpush1.bf16.msra.mxu0 0
    %650 = vmatprep.subr.bf16.mxu0 0
    %651 = vmatpush1.bf16.msra.mxu0 0
    %652 = vmatprep.subr.bf16.mxu0 0
    %653 = vmatpush1.bf16.msra.mxu0 0
    %654 = vmatprep.subr.bf16.mxu0 0
    %655 = vmatpush1.bf16.msra.mxu0 0
    %656 = vmatprep.subr.bf16.mxu0 0
    %657 = vmatpush1.bf16.msra.mxu0 0
    %658 = vmatprep.subr.bf16.mxu0 0
    %659 = vmatpush1.bf16.msra.mxu0 0
    %660 = vmatprep.subr.bf16.mxu0 0
    %661 = vmatpush1.bf16.msra.mxu0 0
    %662 = vmatprep.subr.bf16.mxu0 0
    %663 = vmatpush1.bf16.msra.mxu0 0
    %664 = vmatprep.subr.bf16.mxu0 0
    %665 = vmatpush1.bf16.msra.mxu0 0
    %666 = vmatprep.subr.bf16.mxu0 0
    %667 = vmatpush1.bf16.msra.mxu0 0
    %668 = vmatprep.subr.bf16.mxu0 0
    %669 = vmatpush1.bf16.msra.mxu0 0
    %670 = vmatprep.subr.bf16.mxu0 0
    %671 = vmatpush1.bf16.msra.mxu0 0
    %672 = vmatprep.subr.bf16.mxu0 0
    %673 = vmatpush1.bf16.msra.mxu0 0
    %674 = vmatprep.mubr.bf16.mxu0 0
    %675 = vmatmul.mubr.bf16.gmra.mrb[0].mxu0 %v640
    %v676 = vpop.f32.mrb[0].mxu0
    %v677 = vadd.f32 0.0, %v676
    %v678 = vpop.f32.mrb[0].mxu0
    %v679 = vpop.f32.mrb[0].mxu0
    %v680 = vpop.f32.mrb[0].mxu0
    %681 = vdwg.mxu0
    %v683 = vrot.slane %v677, 5
    %v684 = vrot.slane %v677, 6
    %v687 = vadd.f32 %v249, %v683
    %v688 = vadd.f32 %v252, %v684
    %v689 = vxor.u32 %v687, 2147483648
    %v690 = vxor.u32 %v688, 2147483648
    %v691 = vmul.f32 %v689, 1.442695
    %v692 = vpow.pop %v691
    %v693 = vmul.f32 %v690, 1.442695
    %v694 = vpow.pop %v693
    %v695 = vadd.f32 %v692, 1.0
    %v696 = vadd.f32 %v694, 1.0
    %v697 = vrcp.pop %v695
    %v698 = vmul.f32 1.0, %v697
    %v699 = vrcp.pop %v696
    %v700 = vmul.f32 1.0, %v699
    %v701 = vtanh.pop %v687
    %v702 = vtanh.pop %v688
    %v705 = vrot.slane %v602, 7
    %v706 = vrot.slane %v603, 7
    %v709 = vmul.f32 %v698, %v705
    %v710 = vmul.f32 %v700, %v706
    %713 = vrot.lane.b32.xlu0 %v701, 32
    %v714 = vpop.permute.xlu0 %713
    %715 = vrot.lane.b32.xlu0 %v702, 32
    %v716 = vpop.permute.xlu0 %715
    %v719 = vmul.f32 %v698, %v714
    %v720 = vmul.f32 %v700, %v716
    %723 = vrot.lane.b32.xlu0 %v719, 32
    %v724 = vpop.permute.xlu0 %723
    %725 = vrot.lane.b32.xlu0 %v720, 32
    %v726 = vpop.permute.xlu0 %725
    %v729 = vadd.f32 %v709, %v724
    %v730 = vadd.f32 %v710, %v726
    %v731 = vtanh.pop %v729
    %v732 = vtanh.pop %v730
    %735 = vrot.lane.b32.xlu0 %v731, 32
    %v736 = vpop.permute.xlu0 %735
    %737 = vrot.lane.b32.xlu0 %v732, 32
    %v738 = vpop.permute.xlu0 %737
    %v741 = vmul.f32 %v698, %v736
    %v742 = vmul.f32 %v700, %v738
    %745 = vrot.lane.b32.xlu0 %v741, 64
    %v746 = vpop.permute.xlu0 %745
    %747 = vrot.lane.b32.xlu0 %v742, 64
    %v748 = vpop.permute.xlu0 %747
    %vm751 = vcmask 257027
    %752 = vst.msk [vmem:[#allocation2] sm:$0x8] %vm751, %v746
    %753 = vst.msk [vmem:[#allocation2 + $0x8] sm:$0x8] %vm751, %v748
    %v754 = vpack.c.bf16 %v741, %v741
    %v755 = vpack.c.bf16 %v742, %v742
    %v758 = vunpack.c.l.b16 %v754
    %v759 = vunpack.c.l.b16 %v755
    %v760 = vrot.slane %v758, 3
    %v761 = vrot.slane %v759, 2
    %v762 = vsel %vm382, %v761, %v760
    %v763 = vpack.c.b16 %v762, %v762
    %764 = vrot.lane.b32.xlu0 %v763, 64
    %v765 = vpop.permute.xlu0 %764
    %v767 = vsel %vm210, %v765, 0
    %769 = vmatprep.subr.bf16.mxu0 0
    %770 = vmatpush1.bf16.msra.mxu0 %v263
    %771 = vmatprep.subr.bf16.mxu0 0
    %772 = vmatpush1.bf16.msra.mxu0 %v264
    %773 = vmatprep.subr.bf16.mxu0 0
    %774 = vmatpush1.bf16.msra.mxu0 0
    %775 = vmatprep.subr.bf16.mxu0 0
    %776 = vmatpush1.bf16.msra.mxu0 0
    %777 = vmatprep.subr.bf16.mxu0 0
    %778 = vmatpush1.bf16.msra.mxu0 0
    %779 = vmatprep.subr.bf16.mxu0 0
    %780 = vmatpush1.bf16.msra.mxu0 0
    %781 = vmatprep.subr.bf16.mxu0 0
    %782 = vmatpush1.bf16.msra.mxu0 0
    %783 = vmatprep.subr.bf16.mxu0 0
    %784 = vmatpush1.bf16.msra.mxu0 0
    %785 = vmatprep.subr.bf16.mxu0 0
    %786 = vmatpush1.bf16.msra.mxu0 0
    %787 = vmatprep.subr.bf16.mxu0 0
    %788 = vmatpush1.bf16.msra.mxu0 0
    %789 = vmatprep.subr.bf16.mxu0 0
    %790 = vmatpush1.bf16.msra.mxu0 0
    %791 = vmatprep.subr.bf16.mxu0 0
    %792 = vmatpush1.bf16.msra.mxu0 0
    %793 = vmatprep.subr.bf16.mxu0 0
    %794 = vmatpush1.bf16.msra.mxu0 0
    %795 = vmatprep.subr.bf16.mxu0 0
    %796 = vmatpush1.bf16.msra.mxu0 0
    %797 = vmatprep.subr.bf16.mxu0 0
    %798 = vmatpush1.bf16.msra.mxu0 0
    %799 = vmatprep.subr.bf16.mxu0 0
    %800 = vmatpush1.bf16.msra.mxu0 0
    %801 = vmatprep.mubr.bf16.mxu0 0
    %802 = vmatmul.mubr.bf16.gmra.mrb[0].mxu0 %v767
    %v803 = vpop.f32.mrb[0].mxu0
    %v804 = vadd.f32 0.0, %v803
    %v805 = vpop.f32.mrb[0].mxu0
    %v806 = vpop.f32.mrb[0].mxu0
    %v807 = vpop.f32.mrb[0].mxu0
    %808 = vdwg.mxu0
    %v810 = vrot.slane %v804, 4
    %v811 = vrot.slane %v804, 5
    %v814 = vadd.f32 %v249, %v810
    %v815 = vadd.f32 %v252, %v811
    %v816 = vxor.u32 %v814, 2147483648
    %v817 = vxor.u32 %v815, 2147483648
    %v818 = vmul.f32 %v816, 1.442695
    %v819 = vpow.pop %v818
    %v820 = vmul.f32 %v817, 1.442695
    %v821 = vpow.pop %v820
    %v822 = vadd.f32 %v819, 1.0
    %v823 = vadd.f32 %v821, 1.0
    %v824 = vrcp.pop %v822
    %v825 = vmul.f32 1.0, %v824
    %v826 = vrcp.pop %v823
    %v827 = vmul.f32 1.0, %v826
    %v828 = vtanh.pop %v814
    %v829 = vtanh.pop %v815
    %v832 = vrot.slane %v729, 7
    %v833 = vrot.slane %v730, 7
    %v836 = vmul.f32 %v825, %v832
    %v837 = vmul.f32 %v827, %v833
    %840 = vrot.lane.b32.xlu0 %v828, 32
    %v841 = vpop.permute.xlu0 %840
    %842 = vrot.lane.b32.xlu0 %v829, 32
    %v843 = vpop.permute.xlu0 %842
    %v846 = vmul.f32 %v825, %v841
    %v847 = vmul.f32 %v827, %v843
    %850 = vrot.lane.b32.xlu0 %v846, 32
    %v851 = vpop.permute.xlu0 %850
    %852 = vrot.lane.b32.xlu0 %v847, 32
    %v853 = vpop.permute.xlu0 %852
    %v856 = vadd.f32 %v836, %v851
    %v857 = vadd.f32 %v837, %v853
    %v858 = vtanh.pop %v856
    %v859 = vtanh.pop %v857
    %862 = vrot.lane.b32.xlu0 %v858, 32
    %v863 = vpop.permute.xlu0 %862
    %864 = vrot.lane.b32.xlu0 %v859, 32
    %v865 = vpop.permute.xlu0 %864
    %v868 = vmul.f32 %v825, %v863
    %v869 = vmul.f32 %v827, %v865
    %872 = vrot.lane.b32.xlu0 %v868, 64
    %v873 = vpop.permute.xlu0 %872
    %874 = vrot.lane.b32.xlu0 %v869, 64
    %v875 = vpop.permute.xlu0 %874
    %vm878 = vcmask 258052
    %879 = vst.msk [vmem:[#allocation2] sm:$0x10] %vm878, %v873
    %880 = vst.msk [vmem:[#allocation2 + $0x8] sm:$0x10] %vm878, %v875
    %v881 = vpack.c.bf16 %v868, %v868
    %v882 = vpack.c.bf16 %v869, %v869
    %v885 = vunpack.c.l.b16 %v881
    %v886 = vunpack.c.l.b16 %v882
    %v887 = vrot.slane %v885, 4
    %v888 = vrot.slane %v886, 3
    %v889 = vsel %vm382, %v888, %v887
    %v890 = vpack.c.b16 %v889, %v889
    %891 = vrot.lane.b32.xlu0 %v890, 64
    %v892 = vpop.permute.xlu0 %891
    %v894 = vsel %vm210, %v892, 0
    %896 = vmatprep.subr.bf16.mxu0 0
    %897 = vmatpush1.bf16.msra.mxu0 %v263
    %898 = vmatprep.subr.bf16.mxu0 0
    %899 = vmatpush1.bf16.msra.mxu0 %v264
    %900 = vmatprep.subr.bf16.mxu0 0
    %901 = vmatpush1.bf16.msra.mxu0 0
    %902 = vmatprep.subr.bf16.mxu0 0
    %903 = vmatpush1.bf16.msra.mxu0 0
    %904 = vmatprep.subr.bf16.mxu0 0
    %905 = vmatpush1.bf16.msra.mxu0 0
    %906 = vmatprep.subr.bf16.mxu0 0
    %907 = vmatpush1.bf16.msra.mxu0 0
    %908 = vmatprep.subr.bf16.mxu0 0
    %909 = vmatpush1.bf16.msra.mxu0 0
    %910 = vmatprep.subr.bf16.mxu0 0
    %911 = vmatpush1.bf16.msra.mxu0 0
    %912 = vmatprep.subr.bf16.mxu0 0
    %913 = vmatpush1.bf16.msra.mxu0 0
    %914 = vmatprep.subr.bf16.mxu0 0
    %915 = vmatpush1.bf16.msra.mxu0 0
    %916 = vmatprep.subr.bf16.mxu0 0
    %917 = vmatpush1.bf16.msra.mxu0 0
    %918 = vmatprep.subr.bf16.mxu0 0
    %919 = vmatpush1.bf16.msra.mxu0 0
    %920 = vmatprep.subr.bf16.mxu0 0
    %921 = vmatpush1.bf16.msra.mxu0 0
    %922 = vmatprep.subr.bf16.mxu0 0
    %923 = vmatpush1.bf16.msra.mxu0 0
    %924 = vmatprep.subr.bf16.mxu0 0
    %925 = vmatpush1.bf16.msra.mxu0 0
    %926 = vmatprep.subr.bf16.mxu0 0
    %927 = vmatpush1.bf16.msra.mxu0 0
    %928 = vmatprep.mubr.bf16.mxu0 0
    %929 = vmatmul.mubr.bf16.gmra.mrb[0].mxu0 %v894
    %v930 = vpop.f32.mrb[0].mxu0
    %v931 = vadd.f32 0.0, %v930
    %v932 = vpop.f32.mrb[0].mxu0
    %v933 = vpop.f32.mrb[0].mxu0
    %v934 = vpop.f32.mrb[0].mxu0
    %935 = vdwg.mxu0
    %v937 = vrot.slane %v931, 3
    %v938 = vrot.slane %v931, 4
    %v941 = vadd.f32 %v249, %v937
    %v942 = vadd.f32 %v252, %v938
    %v943 = vxor.u32 %v941, 2147483648
    %v944 = vxor.u32 %v942, 2147483648
    %v945 = vmul.f32 %v943, 1.442695
    %v946 = vpow.pop %v945
    %v947 = vmul.f32 %v944, 1.442695
    %v948 = vpow.pop %v947
    %v949 = vadd.f32 %v946, 1.0
    %v950 = vadd.f32 %v948, 1.0
    %v951 = vrcp.pop %v949
    %v952 = vmul.f32 1.0, %v951
    %v953 = vrcp.pop %v950
    %v954 = vmul.f32 1.0, %v953
    %v955 = vtanh.pop %v941
    %v956 = vtanh.pop %v942
    %v959 = vrot.slane %v856, 7
    %v960 = vrot.slane %v857, 7
    %v963 = vmul.f32 %v952, %v959
    %v964 = vmul.f32 %v954, %v960
    %967 = vrot.lane.b32.xlu0 %v955, 32
    %v968 = vpop.permute.xlu0 %967
    %969 = vrot.lane.b32.xlu0 %v956, 32
    %v970 = vpop.permute.xlu0 %969
    %v973 = vmul.f32 %v952, %v968
    %v974 = vmul.f32 %v954, %v970
    %977 = vrot.lane.b32.xlu0 %v973, 32
    %v978 = vpop.permute.xlu0 %977
    %979 = vrot.lane.b32.xlu0 %v974, 32
    %v980 = vpop.permute.xlu0 %979
    %v983 = vadd.f32 %v963, %v978
    %v984 = vadd.f32 %v964, %v980
    %v985 = vtanh.pop %v983
    %v986 = vtanh.pop %v984
    %989 = vrot.lane.b32.xlu0 %v985, 32
    %v990 = vpop.permute.xlu0 %989
    %991 = vrot.lane.b32.xlu0 %v986, 32
    %v992 = vpop.permute.xlu0 %991
    %v995 = vmul.f32 %v952, %v990
    %v996 = vmul.f32 %v954, %v992
    %999 = vrot.lane.b32.xlu0 %v995, 64
    %v1000 = vpop.permute.xlu0 %999
    %1001 = vrot.lane.b32.xlu0 %v996, 64
    %v1002 = vpop.permute.xlu0 %1001
    %vm1005 = vcmask 259077
    %1006 = vst.msk [vmem:[#allocation2] sm:$0x20] %vm1005, %v1000
    %1007 = vst.msk [vmem:[#allocation2 + $0x8] sm:$0x20] %vm1005, %v1002
    %v1008 = vpack.c.bf16 %v995, %v995
    %v1009 = vpack.c.bf16 %v996, %v996
    %v1012 = vunpack.c.l.b16 %v1008
    %v1013 = vunpack.c.l.b16 %v1009
    %v1014 = vrot.slane %v1012, 5
    %v1015 = vrot.slane %v1013, 4
    %v1016 = vsel %vm382, %v1015, %v1014
    %v1017 = vpack.c.b16 %v1016, %v1016
    %1018 = vrot.lane.b32.xlu0 %v1017, 64
    %v1019 = vpop.permute.xlu0 %1018
    %v1021 = vsel %vm210, %v1019, 0
    %1023 = vmatprep.subr.bf16.mxu0 0
    %1024 = vmatpush1.bf16.msra.mxu0 %v263
    %1025 = vmatprep.subr.bf16.mxu0 0
    %1026 = vmatpush1.bf16.msra.mxu0 %v264
    %1027 = vmatprep.subr.bf16.mxu0 0
    %1028 = vmatpush1.bf16.msra.mxu0 0
    %1029 = vmatprep.subr.bf16.mxu0 0
    %1030 = vmatpush1.bf16.msra.mxu0 0
    %1031 = vmatprep.subr.bf16.mxu0 0
    %1032 = vmatpush1.bf16.msra.mxu0 0
    %1033 = vmatprep.subr.bf16.mxu0 0
    %1034 = vmatpush1.bf16.msra.mxu0 0
    %1035 = vmatprep.subr.bf16.mxu0 0
    %1036 = vmatpush1.bf16.msra.mxu0 0
    %1037 = vmatprep.subr.bf16.mxu0 0
    %1038 = vmatpush1.bf16.msra.mxu0 0
    %1039 = vmatprep.subr.bf16.mxu0 0
    %1040 = vmatpush1.bf16.msra.mxu0 0
    %1041 = vmatprep.subr.bf16.mxu0 0
    %1042 = vmatpush1.bf16.msra.mxu0 0
    %1043 = vmatprep.subr.bf16.mxu0 0
    %1044 = vmatpush1.bf16.msra.mxu0 0
    %1045 = vmatprep.subr.bf16.mxu0 0
    %1046 = vmatpush1.bf16.msra.mxu0 0
    %1047 = vmatprep.subr.bf16.mxu0 0
    %1048 = vmatpush1.bf16.msra.mxu0 0
    %1049 = vmatprep.subr.bf16.mxu0 0
    %1050 = vmatpush1.bf16.msra.mxu0 0
    %1051 = vmatprep.subr.bf16.mxu0 0
    %1052 = vmatpush1.bf16.msra.mxu0 0
    %1053 = vmatprep.subr.bf16.mxu0 0
    %1054 = vmatpush1.bf16.msra.mxu0 0
    %1055 = vmatprep.mubr.bf16.mxu0 0
    %1056 = vmatmul.mubr.bf16.gmra.mrb[0].mxu0 %v1021
    %v1057 = vpop.f32.mrb[0].mxu0
    %v1058 = vadd.f32 0.0, %v1057
    %v1059 = vpop.f32.mrb[0].mxu0
    %v1060 = vpop.f32.mrb[0].mxu0
    %v1061 = vpop.f32.mrb[0].mxu0
    %1062 = vdwg.mxu0
    %v1064 = vrot.slane %v1058, 2
    %v1065 = vrot.slane %v1058, 3
    %v1068 = vadd.f32 %v249, %v1064
    %v1069 = vadd.f32 %v252, %v1065
    %v1070 = vxor.u32 %v1068, 2147483648
    %v1071 = vxor.u32 %v1069, 2147483648
    %v1072 = vmul.f32 %v1070, 1.442695
    %v1073 = vpow.pop %v1072
    %v1074 = vmul.f32 %v1071, 1.442695
    %v1075 = vpow.pop %v1074
    %v1076 = vadd.f32 %v1073, 1.0
    %v1077 = vadd.f32 %v1075, 1.0
    %v1078 = vrcp.pop %v1076
    %v1079 = vmul.f32 1.0, %v1078
    %v1080 = vrcp.pop %v1077
    %v1081 = vmul.f32 1.0, %v1080
    %v1082 = vtanh.pop %v1068
    %v1083 = vtanh.pop %v1069
    %v1086 = vrot.slane %v983, 7
    %v1087 = vrot.slane %v984, 7
    %v1090 = vmul.f32 %v1079, %v1086
    %v1091 = vmul.f32 %v1081, %v1087
    %1094 = vrot.lane.b32.xlu0 %v1082, 32
    %v1095 = vpop.permute.xlu0 %1094
    %1096 = vrot.lane.b32.xlu0 %v1083, 32
    %v1097 = vpop.permute.xlu0 %1096
    %v1100 = vmul.f32 %v1079, %v1095
    %v1101 = vmul.f32 %v1081, %v1097
    %1104 = vrot.lane.b32.xlu0 %v1100, 32
    %v1105 = vpop.permute.xlu0 %1104
    %1106 = vrot.lane.b32.xlu0 %v1101, 32
    %v1107 = vpop.permute.xlu0 %1106
    %v1110 = vadd.f32 %v1090, %v1105
    %v1111 = vadd.f32 %v1091, %v1107
    %v1112 = vtanh.pop %v1110
    %v1113 = vtanh.pop %v1111
    %1116 = vrot.lane.b32.xlu0 %v1112, 32
    %v1117 = vpop.permute.xlu0 %1116
    %1118 = vrot.lane.b32.xlu0 %v1113, 32
    %v1119 = vpop.permute.xlu0 %1118
    %v1122 = vmul.f32 %v1079, %v1117
    %v1123 = vmul.f32 %v1081, %v1119
    %1126 = vrot.lane.b32.xlu0 %v1122, 64
    %v1127 = vpop.permute.xlu0 %1126
    %1128 = vrot.lane.b32.xlu0 %v1123, 64
    %v1129 = vpop.permute.xlu0 %1128
    %vm1132 = vcmask 260102
    %1133 = vst.msk [vmem:[#allocation2] sm:$0x40] %vm1132, %v1127
    %1134 = vst.msk [vmem:[#allocation2 + $0x8] sm:$0x40] %vm1132, %v1129
    %v1135 = vpack.c.bf16 %v1122, %v1122
    %v1136 = vpack.c.bf16 %v1123, %v1123
    %v1139 = vunpack.c.l.b16 %v1135
    %v1140 = vunpack.c.l.b16 %v1136
    %v1141 = vrot.slane %v1139, 6
    %v1142 = vrot.slane %v1140, 5
    %v1143 = vsel %vm382, %v1142, %v1141
    %v1144 = vpack.c.b16 %v1143, %v1143
    %1145 = vrot.lane.b32.xlu0 %v1144, 64
    %v1146 = vpop.permute.xlu0 %1145
    %v1148 = vsel %vm210, %v1146, 0
    %1150 = vmatprep.subr.bf16.mxu0 0
    %1151 = vmatpush1.bf16.msra.mxu0 %v263
    %1152 = vmatprep.subr.bf16.mxu0 0
    %1153 = vmatpush1.bf16.msra.mxu0 %v264
    %1154 = vmatprep.subr.bf16.mxu0 0
    %1155 = vmatpush1.bf16.msra.mxu0 0
    %1156 = vmatprep.subr.bf16.mxu0 0
    %1157 = vmatpush1.bf16.msra.mxu0 0
    %1158 = vmatprep.subr.bf16.mxu0 0
    %1159 = vmatpush1.bf16.msra.mxu0 0
    %1160 = vmatprep.subr.bf16.mxu0 0
    %1161 = vmatpush1.bf16.msra.mxu0 0
    %1162 = vmatprep.subr.bf16.mxu0 0
    %1163 = vmatpush1.bf16.msra.mxu0 0
    %1164 = vmatprep.subr.bf16.mxu0 0
    %1165 = vmatpush1.bf16.msra.mxu0 0
    %1166 = vmatprep.subr.bf16.mxu0 0
    %1167 = vmatpush1.bf16.msra.mxu0 0
    %1168 = vmatprep.subr.bf16.mxu0 0
    %1169 = vmatpush1.bf16.msra.mxu0 0
    %1170 = vmatprep.subr.bf16.mxu0 0
    %1171 = vmatpush1.bf16.msra.mxu0 0
    %1172 = vmatprep.subr.bf16.mxu0 0
    %1173 = vmatpush1.bf16.msra.mxu0 0
    %1174 = vmatprep.subr.bf16.mxu0 0
    %1175 = vmatpush1.bf16.msra.mxu0 0
    %1176 = vmatprep.subr.bf16.mxu0 0
    %1177 = vmatpush1.bf16.msra.mxu0 0
    %1178 = vmatprep.subr.bf16.mxu0 0
    %1179 = vmatpush1.bf16.msra.mxu0 0
    %1180 = vmatprep.subr.bf16.mxu0 0
    %1181 = vmatpush1.bf16.msra.mxu0 0
    %1182 = vmatprep.mubr.bf16.mxu0 0
    %1183 = vmatmul.mubr.bf16.gmra.mrb[0].mxu0 %v1148
    %v1184 = vpop.f32.mrb[0].mxu0
    %v1185 = vadd.f32 0.0, %v1184
    %v1186 = vpop.f32.mrb[0].mxu0
    %v1187 = vpop.f32.mrb[0].mxu0
    %v1188 = vpop.f32.mrb[0].mxu0
    %1189 = vdwg.mxu0
    %v1191 = vrot.slane %v1185, 1
    %v1192 = vrot.slane %v1185, 2
    %v1195 = vadd.f32 %v249, %v1191
    %v1196 = vadd.f32 %v252, %v1192
    %v1197 = vxor.u32 %v1195, 2147483648
    %v1198 = vxor.u32 %v1196, 2147483648
    %v1199 = vmul.f32 %v1197, 1.442695
    %v1200 = vpow.pop %v1199
    %v1201 = vmul.f32 %v1198, 1.442695
    %v1202 = vpow.pop %v1201
    %v1203 = vadd.f32 %v1200, 1.0
    %v1204 = vadd.f32 %v1202, 1.0
    %v1205 = vrcp.pop %v1203
    %v1206 = vmul.f32 1.0, %v1205
    %v1207 = vrcp.pop %v1204
    %v1208 = vmul.f32 1.0, %v1207
    %v1209 = vtanh.pop %v1195
    %v1210 = vtanh.pop %v1196
    %v1213 = vrot.slane %v1110, 7
    %v1214 = vrot.slane %v1111, 7
    %v1217 = vmul.f32 %v1206, %v1213
    %v1218 = vmul.f32 %v1208, %v1214
    %1221 = vrot.lane.b32.xlu0 %v1209, 32
    %v1222 = vpop.permute.xlu0 %1221
    %1223 = vrot.lane.b32.xlu0 %v1210, 32
    %v1224 = vpop.permute.xlu0 %1223
    %v1227 = vmul.f32 %v1206, %v1222
    %v1228 = vmul.f32 %v1208, %v1224
    %1231 = vrot.lane.b32.xlu0 %v1227, 32
    %v1232 = vpop.permute.xlu0 %1231
    %1233 = vrot.lane.b32.xlu0 %v1228, 32
    %v1234 = vpop.permute.xlu0 %1233
    %v1237 = vadd.f32 %v1217, %v1232
    %v1238 = vadd.f32 %v1218, %v1234
    %v1239 = vtanh.pop %v1237
    %v1240 = vtanh.pop %v1238
    %1243 = vrot.lane.b32.xlu0 %v1239, 32
    %v1244 = vpop.permute.xlu0 %1243
    %1245 = vrot.lane.b32.xlu0 %v1240, 32
    %v1246 = vpop.permute.xlu0 %1245
    %v1249 = vmul.f32 %v1206, %v1244
    %v1250 = vmul.f32 %v1208, %v1246
    %1253 = vrot.lane.b32.xlu0 %v1249, 64
    %v1254 = vpop.permute.xlu0 %1253
    %1255 = vrot.lane.b32.xlu0 %v1250, 64
    %v1256 = vpop.permute.xlu0 %1255
    %vm1259 = vcmask 261127
    %1260 = vst.msk [vmem:[#allocation2] sm:$0x80] %vm1259, %v1254
    %1261 = vst.msk [vmem:[#allocation2 + $0x8] sm:$0x80] %vm1259, %v1256
    %v1262 = vld [vmem:[#allocation2] sm:$0xff]
    %v1263 = vld [vmem:[#allocation2 + $0x8] sm:$0xff]
    %v1264 = vld [vmem:[#allocation6 + $0x40] sm:$0xf]
    %v1265 = vld [vmem:[#allocation6 + $0x44] sm:$0xf]
    %v1266 = vld [vmem:[#allocation6 + $0x48] sm:$0xf]
    %v1267 = vld [vmem:[#allocation6 + $0x4c] sm:$0xf]
    %v1268 = vld [vmem:[#allocation6 + $0x50] sm:$0xf]
    %v1269 = vld [vmem:[#allocation6 + $0x54] sm:$0xf]
    %v1270 = vld [vmem:[#allocation6 + $0x58] sm:$0xf]
    %v1271 = vld [vmem:[#allocation6 + $0x5c] sm:$0xf]
    %v1272 = vld [vmem:[#allocation6 + $0x60] sm:$0xf]
    %v1273 = vld [vmem:[#allocation6 + $0x64] sm:$0xf]
    %v1274 = vld [vmem:[#allocation6 + $0x68] sm:$0xf]
    %v1275 = vpack.c.bf16 %v55, %v54
    %v1276 = vpack.c.bf16 %v57, %v56
    %v1277 = vld [vmem:[%s4 + $0x1] sm:$0x1]
    %v1278 = vlaneseq
    %v1279 = vshrl.u32 %v1278, 7
    %v1280 = vsub.s32 0, %v1279
    %v1281 = vrot.slane %v1277, %v1280
    %v1288 = vunpack.c.l.b16 %v1264
    %v1289 = vunpack.c.l.b16 %v1265
    %v1290 = vunpack.c.l.b16 %v1266
    %v1291 = vunpack.c.l.b16 %v1267
    %v1292 = vunpack.c.l.b16 %v1268
    %v1293 = vunpack.c.l.b16 %v1269
    %v1294 = vpack.c.b16 %v1289, %v1288
    %v1295 = vpack.c.b16 %v1291, %v1290
    %v1296 = vpack.c.b16 %v1293, %v1292
    %v1301 = vsel %vm64, %v1275, 0
    %v1304 = vsel %vm64, %v1276, 0
    %1306 = vmatprep.subr.bf16.mxu0 0
    %1307 = vmatpush1.bf16.msra.mxu0 %v1294
    %1308 = vmatprep.subr.bf16.mxu0 0
    %1309 = vmatpush1.bf16.msra.mxu0 %v1295
    %1310 = vmatprep.subr.bf16.mxu0 0
    %1311 = vmatpush1.bf16.msra.mxu0 %v1296
    %1312 = vmatprep.subr.bf16.mxu0 0
    %1313 = vmatpush1.bf16.msra.mxu0 0
    %1314 = vmatprep.subr.bf16.mxu0 0
    %1315 = vmatpush1.bf16.msra.mxu0 0
    %1316 = vmatprep.subr.bf16.mxu0 0
    %1317 = vmatpush1.bf16.msra.mxu0 0
    %1318 = vmatprep.subr.bf16.mxu0 0
    %1319 = vmatpush1.bf16.msra.mxu0 0
    %1320 = vmatprep.subr.bf16.mxu0 0
    %1321 = vmatpush1.bf16.msra.mxu0 0
    %1322 = vmatprep.subr.bf16.mxu0 0
    %1323 = vmatpush1.bf16.msra.mxu0 0
    %1324 = vmatprep.subr.bf16.mxu0 0
    %1325 = vmatpush1.bf16.msra.mxu0 0
    %1326 = vmatprep.subr.bf16.mxu0 0
    %1327 = vmatpush1.bf16.msra.mxu0 0
    %1328 = vmatprep.subr.bf16.mxu0 0
    %1329 = vmatpush1.bf16.msra.mxu0 0
    %1330 = vmatprep.subr.bf16.mxu0 0
    %1331 = vmatpush1.bf16.msra.mxu0 0
    %1332 = vmatprep.subr.bf16.mxu0 0
    %1333 = vmatpush1.bf16.msra.mxu0 0
    %1334 = vmatprep.subr.bf16.mxu0 0
    %1335 = vmatpush1.bf16.msra.mxu0 0
    %1336 = vmatprep.subr.bf16.mxu0 0
    %1337 = vmatpush1.bf16.msra.mxu0 0
    %1338 = vmatprep.mubr.bf16.mxu0 0
    %1339 = vmatmul.mubr.bf16.gmra.mrb[0].mxu0 %v1301
    %v1340 = vpop.f32.mrb[0].mxu0
    %v1341 = vadd.f32 %v1281, %v1340
    %v1342 = vpop.f32.mrb[0].mxu0
    %v1343 = vpop.f32.mrb[0].mxu0
    %v1344 = vadd.f32 %v1281, %v1343
    %v1345 = vpop.f32.mrb[0].mxu0
    %1346 = vmatprep.mubr.bf16.mxu0 0
    %1347 = vmatmul.mubr.bf16.gmra.mrb[0].mxu0 %v1304
    %v1348 = vpop.f32.mrb[0].mxu0
    %v1349 = vadd.f32 %v1281, %v1348
    %v1350 = vpop.f32.mrb[0].mxu0
    %v1351 = vpop.f32.mrb[0].mxu0
    %v1352 = vadd.f32 %v1281, %v1351
    %v1353 = vpop.f32.mrb[0].mxu0
    %1354 = vdwg.mxu0
    %v1355 = vpack.c.bf16 %v59, %v58
    %v1356 = vld [vmem:[%s4 + $0x2] sm:$0x1]
    %v1357 = vlaneseq
    %v1358 = vshrl.u32 %v1357, 7
    %v1359 = vsub.s32 0, %v1358
    %v1360 = vrot.slane %v1356, %v1359
    %v1366 = vunpack.c.l.b16 %v1270
    %v1367 = vunpack.c.l.b16 %v1271
    %v1368 = vunpack.c.l.b16 %v1272
    %v1369 = vunpack.c.l.b16 %v1273
    %v1370 = vunpack.c.l.b16 %v1274
    %v1371 = vpack.c.b16 %v1367, %v1366
    %v1372 = vpack.c.b16 %v1369, %v1368
    %v1373 = vpack.c.b16 %v1370, %v1370
    %v1377 = vsel %vm79, %v1355, 0
    %vm1379 = vcmask 1043456
    %v1381 = vsel %vm1379, %v1373, 0
    %1383 = vmatprep.subr.bf16.mxu0 0
    %1384 = vmatpush1.bf16.msra.mxu0 %v1371
    %1385 = vmatprep.subr.bf16.mxu0 0
    %1386 = vmatpush1.bf16.msra.mxu0 %v1372
    %1387 = vmatprep.subr.bf16.mxu0 0
    %1388 = vmatpush1.bf16.msra.mxu0 %v1381
    %1389 = vmatprep.subr.bf16.mxu0 0
    %1390 = vmatpush1.bf16.msra.mxu0 0
    %1391 = vmatprep.subr.bf16.mxu0 0
    %1392 = vmatpush1.bf16.msra.mxu0 0
    %1393 = vmatprep.subr.bf16.mxu0 0
    %1394 = vmatpush1.bf16.msra.mxu0 0
    %1395 = vmatprep.subr.bf16.mxu0 0
    %1396 = vmatpush1.bf16.msra.mxu0 0
    %1397 = vmatprep.subr.bf16.mxu0 0
    %1398 = vmatpush1.bf16.msra.mxu0 0
    %1399 = vmatprep.subr.bf16.mxu0 0
    %1400 = vmatpush1.bf16.msra.mxu0 0
    %1401 = vmatprep.subr.bf16.mxu0 0
    %1402 = vmatpush1.bf16.msra.mxu0 0
    %1403 = vmatprep.subr.bf16.mxu0 0
    %1404 = vmatpush1.bf16.msra.mxu0 0
    %1405 = vmatprep.subr.bf16.mxu0 0
    %1406 = vmatpush1.bf16.msra.mxu0 0
    %1407 = vmatprep.subr.bf16.mxu0 0
    %1408 = vmatpush1.bf16.msra.mxu0 0
    %1409 = vmatprep.subr.bf16.mxu0 0
    %1410 = vmatpush1.bf16.msra.mxu0 0
    %1411 = vmatprep.subr.bf16.mxu0 0
    %1412 = vmatpush1.bf16.msra.mxu0 0
    %1413 = vmatprep.subr.bf16.mxu0 0
    %1414 = vmatpush1.bf16.msra.mxu0 0
    %1415 = vmatprep.mubr.bf16.mxu0 0
    %1416 = vmatmul.mubr.bf16.gmra.mrb[0].mxu0 %v1377
    %v1417 = vpop.f32.mrb[0].mxu0
    %v1418 = vadd.f32 %v1360, %v1417
    %v1419 = vpop.f32.mrb[0].mxu0
    %v1420 = vpop.f32.mrb[0].mxu0
    %v1421 = vadd.f32 %v1360, %v1420
    %v1422 = vpop.f32.mrb[0].mxu0
    %1423 = vdwg.mxu0
    %v1424 = vld [vmem:[#allocation6 + $0x70] sm:$0xf]
    %v1425 = vld [vmem:[#allocation6 + $0x74] sm:$0xf]
    %v1426 = vld [vmem:[#allocation6 + $0x78] sm:$0xf]
    %v1427 = vld [vmem:[#allocation6 + $0x7c] sm:$0xf]
    %v1428 = vpack.c.bf16 %v1263, %v1262
    %v1429 = vld [vmem:[%s4 + $0x3] sm:$0x1]
    %v1430 = vlaneseq
    %v1431 = vshrl.u32 %v1430, 7
    %v1432 = vsub.s32 0, %v1431
    %v1433 = vrot.slane %v1429, %v1432
    %v1438 = vunpack.c.l.b16 %v1424
    %v1439 = vunpack.c.l.b16 %v1425
    %v1440 = vunpack.c.l.b16 %v1426
    %v1441 = vunpack.c.l.b16 %v1427
    %v1442 = vpack.c.b16 %v1439, %v1438
    %v1443 = vpack.c.b16 %v1441, %v1440
    %v1447 = vsel %vm210, %v1428, 0
    %1449 = vmatprep.subr.bf16.mxu0 0
    %1450 = vmatpush1.bf16.msra.mxu0 %v1442
    %1451 = vmatprep.subr.bf16.mxu0 0
    %1452 = vmatpush1.bf16.msra.mxu0 %v1443
    %1453 = vmatprep.subr.bf16.mxu0 0
    %1454 = vmatpush1.bf16.msra.mxu0 0
    %1455 = vmatprep.subr.bf16.mxu0 0
    %1456 = vmatpush1.bf16.msra.mxu0 0
    %1457 = vmatprep.subr.bf16.mxu0 0
    %1458 = vmatpush1.bf16.msra.mxu0 0
    %1459 = vmatprep.subr.bf16.mxu0 0
    %1460 = vmatpush1.bf16.msra.mxu0 0
    %1461 = vmatprep.subr.bf16.mxu0 0
    %1462 = vmatpush1.bf16.msra.mxu0 0
    %1463 = vmatprep.subr.bf16.mxu0 0
    %1464 = vmatpush1.bf16.msra.mxu0 0
    %1465 = vmatprep.subr.bf16.mxu0 0
    %1466 = vmatpush1.bf16.msra.mxu0 0
    %1467 = vmatprep.subr.bf16.mxu0 0
    %1468 = vmatpush1.bf16.msra.mxu0 0
    %1469 = vmatprep.subr.bf16.mxu0 0
    %1470 = vmatpush1.bf16.msra.mxu0 0
    %1471 = vmatprep.subr.bf16.mxu0 0
    %1472 = vmatpush1.bf16.msra.mxu0 0
    %1473 = vmatprep.subr.bf16.mxu0 0
    %1474 = vmatpush1.bf16.msra.mxu0 0
    %1475 = vmatprep.subr.bf16.mxu0 0
    %1476 = vmatpush1.bf16.msra.mxu0 0
    %1477 = vmatprep.subr.bf16.mxu0 0
    %1478 = vmatpush1.bf16.msra.mxu0 0
    %1479 = vmatprep.subr.bf16.mxu0 0
    %1480 = vmatpush1.bf16.msra.mxu0 0
    %1481 = vmatprep.mubr.bf16.mxu0 0
    %1482 = vmatmul.mubr.bf16.gmra.mrb[0].mxu0 %v1447
    %v1483 = vpop.f32.mrb[0].mxu0
    %v1484 = vadd.f32 %v1433, %v1483
    %v1485 = vpop.f32.mrb[0].mxu0
    %v1486 = vpop.f32.mrb[0].mxu0
    %v1487 = vadd.f32 %v1433, %v1486
    %v1488 = vpop.f32.mrb[0].mxu0
    %1489 = vdwg.mxu0
    %v1490 = vmax.f32 %v1484, 0.0
    %v1491 = vmax.f32 %v1487, 0.0
    %v1492 = vld [vmem:[%s4 + $0x5] sm:$0x1]
    %v1493 = vld [vmem:[%s4 + $0x7] sm:$0x1]
    %v1494 = vlaneseq
    %v1495 = vshrl.u32 %v1494, 7
    %v1496 = vsub.s32 0, %v1495
    %v1497 = vrot.slane %v1492, %v1496
    %v1498 = vmul.f32 %v1490, %v1497
    %v1499 = vmul.f32 %v1491, %v1497
    %v1500 = vsel %vm139, %v1498, 0.0
    %1501 = vadd.xlane.f32.xlu0 %v1500
    %v1502 = vpop.xlane.xlu0 %1501
    %v1503 = vsel %vm139, %v1499, 0.0
    %1504 = vadd.xlane.f32.xlu0 %v1503
    %v1505 = vpop.xlane.xlu0 %1504
    %v1506 = vlaneseq
    %v1507 = vshrl.u32 %v1506, 7
    %v1508 = vsub.s32 0, %v1507
    %v1509 = vrot.slane %v1493, %v1508
    %v1510 = vadd.f32 %v1502, %v1509
    %v1511 = vadd.f32 %v1505, %v1509
    %v1512 = vsel %vm52, -1e+09, %v1510
    %v1513 = vsel %vm53, -1e+09, %v1511
    %vm1514 = vcmask 7168
    %v1515 = vsel %vm1514, %v1512, -inf
    %v1516 = vrot.slane %v1515, 4
    %v1517 = vmax.f32 %v1515, %v1516
    %v1518 = vrot.slane %v1517, 2
    %v1519 = vmax.f32 %v1517, %v1518
    %v1520 = vrot.slane %v1519, 1
    %v1521 = vmax.f32 %v1519, %v1520
    %v1522 = vsel %vm1514, %v1513, -inf
    %v1523 = vrot.slane %v1522, 4
    %v1524 = vmax.f32 %v1522, %v1523
    %v1525 = vrot.slane %v1524, 2
    %v1526 = vmax.f32 %v1524, %v1525
    %v1527 = vrot.slane %v1526, 1
    %v1528 = vmax.f32 %v1526, %v1527
    %v1529 = vsub.f32 %v1512, %v1521
    %v1530 = vsub.f32 %v1513, %v1528
    %v1531 = vmul.f32 %v1529, 1.442695
    %v1532 = vpow.pop %v1531
    %v1533 = vmul.f32 %v1530, 1.442695
    %v1534 = vpow.pop %v1533
    %v1535 = vsel %vm1514, %v1532, 0.0
    %v1536 = vrot.slane %v1535, 4
    %v1537 = vadd.f32 %v1535, %v1536
    %v1538 = vrot.slane %v1537, 2
    %v1539 = vadd.f32 %v1537, %v1538
    %v1540 = vrot.slane %v1539, 1
    %v1541 = vadd.f32 %v1539, %v1540
    %v1542 = vsel %vm1514, %v1534, 0.0
    %v1543 = vrot.slane %v1542, 4
    %v1544 = vadd.f32 %v1542, %v1543
    %v1545 = vrot.slane %v1544, 2
    %v1546 = vadd.f32 %v1544, %v1545
    %v1547 = vrot.slane %v1546, 1
    %v1548 = vadd.f32 %v1546, %v1547
    %v1549 = vrcp.pop %v1541
    %v1550 = vmul.f32 %v1532, %v1549
    %v1551 = vrcp.pop %v1548
    %v1552 = vmul.f32 %v1534, %v1551
    %1554 = vset.pattern.permute.xlu0 0
    %1555 = vperm.xlu0 %1554, %v1550
    %v1556 = vpop.permute.xlu0 %1555
    %1559 = vset.pattern.permute.xlu0 0
    %1560 = vperm.xlu0 %1559, %v1552
    %v1561 = vpop.permute.xlu0 %1560
    %v1563 = vmul.f32 %v1556, %v1262
    %v1564 = vmul.f32 %v1561, %v1263
    %v1565 = vsel %vm210, %v1563, 0.0
    %v1566 = vrot.slane %v1565, 4
    %v1567 = vadd.f32 %v1565, %v1566
    %v1568 = vrot.slane %v1567, 2
    %v1569 = vadd.f32 %v1567, %v1568
    %v1570 = vrot.slane %v1569, 1
    %v1571 = vadd.f32 %v1569, %v1570
    %v1572 = vsel %vm210, %v1564, 0.0
    %v1573 = vrot.slane %v1572, 4
    %v1574 = vadd.f32 %v1572, %v1573
    %v1575 = vrot.slane %v1574, 2
    %v1576 = vadd.f32 %v1574, %v1575
    %v1577 = vrot.slane %v1576, 1
    %v1578 = vadd.f32 %v1576, %v1577
    %v1579 = vld [vmem:[#allocation6 + $0x80] sm:$0xf]
    %v1580 = vld [vmem:[#allocation6 + $0x84] sm:$0xf]
    %v1581 = vld [vmem:[#allocation6 + $0x88] sm:$0xf]
    %v1582 = vld [vmem:[#allocation6 + $0x8c] sm:$0xf]
    %v1583 = vpack.c.bf16 %v1344, %v1341
    %v1584 = vpack.c.bf16 %v1349, %v1418
    %v1585 = vpack.c.bf16 %v1421, %v1352
    %v1586 = vld [vmem:[%s4 + $0x4] sm:$0x1]
    %v1587 = vlaneseq
    %v1588 = vshrl.u32 %v1587, 7
    %v1589 = vsub.s32 0, %v1588
    %v1590 = vrot.slane %v1586, %v1589
    %v1595 = vunpack.c.l.b16 %v1579
    %v1596 = vunpack.c.l.b16 %v1580
    %v1597 = vunpack.c.l.b16 %v1581
    %v1598 = vunpack.c.l.b16 %v1582
    %v1599 = vpack.c.b16 %v1596, %v1595
    %v1600 = vpack.c.b16 %v1598, %v1597
    %v1604 = vsel %vm210, %v1583, 0
    %v1607 = vsel %vm210, %v1584, 0
    %v1610 = vsel %vm210, %v1585, 0
    %1612 = vmatprep.subr.bf16.mxu0 0
    %1613 = vmatpush1.bf16.msra.mxu0 %v1599
    %1614 = vmatprep.subr.bf16.mxu0 0
    %1615 = vmatpush1.bf16.msra.mxu0 %v1600
    %1616 = vmatprep.subr.bf16.mxu0 0
    %1617 = vmatpush1.bf16.msra.mxu0 0
    %1618 = vmatprep.subr.bf16.mxu0 0
    %1619 = vmatpush1.bf16.msra.mxu0 0
    %1620 = vmatprep.subr.bf16.mxu0 0
    %1621 = vmatpush1.bf16.msra.mxu0 0
    %1622 = vmatprep.subr.bf16.mxu0 0
    %1623 = vmatpush1.bf16.msra.mxu0 0
    %1624 = vmatprep.subr.bf16.mxu0 0
    %1625 = vmatpush1.bf16.msra.mxu0 0
    %1626 = vmatprep.subr.bf16.mxu0 0
    %1627 = vmatpush1.bf16.msra.mxu0 0
    %1628 = vmatprep.subr.bf16.mxu0 0
    %1629 = vmatpush1.bf16.msra.mxu0 0
    %1630 = vmatprep.subr.bf16.mxu0 0
    %1631 = vmatpush1.bf16.msra.mxu0 0
    %1632 = vmatprep.subr.bf16.mxu0 0
    %1633 = vmatpush1.bf16.msra.mxu0 0
    %1634 = vmatprep.subr.bf16.mxu0 0
    %1635 = vmatpush1.bf16.msra.mxu0 0
    %1636 = vmatprep.subr.bf16.mxu0 0
    %1637 = vmatpush1.bf16.msra.mxu0 0
    %1638 = vmatprep.subr.bf16.mxu0 0
    %1639 = vmatpush1.bf16.msra.mxu0 0
    %1640 = vmatprep.subr.bf16.mxu0 0
    %1641 = vmatpush1.bf16.msra.mxu0 0
    %1642 = vmatprep.subr.bf16.mxu0 0
    %1643 = vmatpush1.bf16.msra.mxu0 0
    %1644 = vmatprep.mubr.bf16.mxu0 0
    %1645 = vmatmul.mubr.bf16.gmra.mrb[0].mxu0 %v1604
    %v1646 = vpop.f32.mrb[0].mxu0
    %v1647 = vadd.f32 %v1590, %v1646
    %v1648 = vpop.f32.mrb[0].mxu0
    %v1649 = vpop.f32.mrb[0].mxu0
    %v1650 = vadd.f32 %v1590, %v1649
    %v1651 = vpop.f32.mrb[0].mxu0
    %1652 = vmatprep.mubr.bf16.mxu0 0
    %1653 = vmatmul.mubr.bf16.gmra.mrb[0].mxu0 %v1607
    %v1654 = vpop.f32.mrb[0].mxu0
    %v1655 = vadd.f32 %v1590, %v1654
    %v1656 = vpop.f32.mrb[0].mxu0
    %v1657 = vpop.f32.mrb[0].mxu0
    %v1658 = vadd.f32 %v1590, %v1657
    %v1659 = vpop.f32.mrb[0].mxu0
    %1660 = vmatprep.mubr.bf16.mxu0 0
    %1661 = vmatmul.mubr.bf16.gmra.mrb[0].mxu0 %v1610
    %v1662 = vpop.f32.mrb[0].mxu0
    %v1663 = vadd.f32 %v1590, %v1662
    %v1664 = vpop.f32.mrb[0].mxu0
    %v1665 = vpop.f32.mrb[0].mxu0
    %v1666 = vadd.f32 %v1590, %v1665
    %v1667 = vpop.f32.mrb[0].mxu0
    %1668 = vdwg.mxu0
    %v1669 = vmax.f32 %v1647, 0.0
    %v1670 = vmax.f32 %v1650, 0.0
    %v1671 = vmax.f32 %v1655, 0.0
    %v1672 = vmax.f32 %v1658, 0.0
    %v1673 = vmax.f32 %v1663, 0.0
    %v1674 = vmax.f32 %v1666, 0.0
    %v1675 = vld [vmem:[%s4 + $0x6] sm:$0x1]
    %v1676 = vlaneseq
    %v1677 = vshrl.u32 %v1676, 7
    %v1678 = vsub.s32 0, %v1677
    %v1679 = vrot.slane %v1675, %v1678
    %v1680 = vmul.f32 %v1669, %v1679
    %v1681 = vmul.f32 %v1670, %v1679
    %v1682 = vmul.f32 %v1671, %v1679
    %v1683 = vmul.f32 %v1672, %v1679
    %v1684 = vmul.f32 %v1673, %v1679
    %v1685 = vmul.f32 %v1674, %v1679
    %v1686 = vsel %vm139, %v1680, 0.0
    %1687 = vadd.xlane.f32.xlu0 %v1686
    %v1688 = vpop.xlane.xlu0 %1687
    %v1689 = vsel %vm139, %v1681, 0.0
    %1690 = vadd.xlane.f32.xlu0 %v1689
    %v1691 = vpop.xlane.xlu0 %1690
    %v1692 = vsel %vm139, %v1682, 0.0
    %1693 = vadd.xlane.f32.xlu0 %v1692
    %v1694 = vpop.xlane.xlu0 %1693
    %v1695 = vsel %vm139, %v1683, 0.0
    %1696 = vadd.xlane.f32.xlu0 %v1695
    %v1697 = vpop.xlane.xlu0 %1696
    %v1698 = vsel %vm139, %v1684, 0.0
    %1699 = vadd.xlane.f32.xlu0 %v1698
    %v1700 = vpop.xlane.xlu0 %1699
    %v1701 = vsel %vm139, %v1685, 0.0
    %1702 = vadd.xlane.f32.xlu0 %v1701
    %v1703 = vpop.xlane.xlu0 %1702
    %v1704 = vadd.f32 %v1688, %v1509
    %v1705 = vadd.f32 %v1691, %v1509
    %v1706 = vadd.f32 %v1694, %v1509
    %v1707 = vadd.f32 %v1697, %v1509
    %v1708 = vadd.f32 %v1700, %v1509
    %v1709 = vadd.f32 %v1703, %v1509
    %1716 = vrot.lane.b32.xlu0 %v1704, 127
    %v1717 = vpop.permute.xlu0 %1716
    %1718 = vrot.lane.b32.xlu0 %v1705, 127
    %v1719 = vpop.permute.xlu0 %1718
    %1720 = vrot.lane.b32.xlu0 %v1706, 127
    %v1721 = vpop.permute.xlu0 %1720
    %1722 = vrot.lane.b32.xlu0 %v1707, 127
    %v1723 = vpop.permute.xlu0 %1722
    %1724 = vrot.lane.b32.xlu0 %v1708, 127
    %v1725 = vpop.permute.xlu0 %1724
    %1726 = vrot.lane.b32.xlu0 %v1709, 127
    %v1727 = vpop.permute.xlu0 %1726
    %v1734 = vsel %vm86, -1e+09, %v1717
    %v1735 = vsel %vm87, -1e+09, %v1719
    %v1736 = vsel %vm88, -1e+09, %v1721
    %v1737 = vsel %vm89, -1e+09, %v1723
    %v1738 = vsel %vm90, -1e+09, %v1725
    %v1739 = vsel %vm91, -1e+09, %v1727
    %v1740 = vsel %vm1514, %v1734, -inf
    %v1741 = vsel %vm1514, %v1735, -inf
    %v1742 = vsel %vm1514, %v1736, -inf
    %v1743 = vmax.f32 %v1740, %v1742
    %v1744 = vmax.f32 %v1743, %v1741
    %v1745 = vrot.slane %v1744, 4
    %v1746 = vmax.f32 %v1744, %v1745
    %v1747 = vrot.slane %v1746, 2
    %v1748 = vmax.f32 %v1746, %v1747
    %v1749 = vrot.slane %v1748, 1
    %v1750 = vmax.f32 %v1748, %v1749
    %v1751 = vsel %vm1514, %v1737, -inf
    %v1752 = vsel %vm1514, %v1738, -inf
    %v1753 = vsel %vm1514, %v1739, -inf
    %v1754 = vmax.f32 %v1751, %v1753
    %v1755 = vmax.f32 %v1754, %v1752
    %v1756 = vrot.slane %v1755, 4
    %v1757 = vmax.f32 %v1755, %v1756
    %v1758 = vrot.slane %v1757, 2
    %v1759 = vmax.f32 %v1757, %v1758
    %v1760 = vrot.slane %v1759, 1
    %v1761 = vmax.f32 %v1759, %v1760
    %v1762 = vsub.f32 %v1734, %v1750
    %v1763 = vsub.f32 %v1735, %v1750
    %v1764 = vsub.f32 %v1736, %v1750
    %v1765 = vsub.f32 %v1737, %v1761
    %v1766 = vsub.f32 %v1738, %v1761
    %v1767 = vsub.f32 %v1739, %v1761
    %v1768 = vmul.f32 %v1762, 1.442695
    %v1769 = vpow.pop %v1768
    %v1770 = vmul.f32 %v1763, 1.442695
    %v1771 = vpow.pop %v1770
    %v1772 = vmul.f32 %v1764, 1.442695
    %v1773 = vpow.pop %v1772
    %v1774 = vmul.f32 %v1765, 1.442695
    %v1775 = vpow.pop %v1774
    %v1776 = vmul.f32 %v1766, 1.442695
    %v1777 = vpow.pop %v1776
    %v1778 = vmul.f32 %v1767, 1.442695
    %v1779 = vpow.pop %v1778
    %v1780 = vsel %vm1514, %v1769, 0.0
    %v1781 = vsel %vm1514, %v1771, 0.0
    %v1782 = vadd.f32 %v1780, %v1781
    %v1783 = vsel %vm1514, %v1773, 0.0
    %v1784 = vadd.f32 %v1782, %v1783
    %v1785 = vrot.slane %v1784, 4
    %v1786 = vadd.f32 %v1784, %v1785
    %v1787 = vrot.slane %v1786, 2
    %v1788 = vadd.f32 %v1786, %v1787
    %v1789 = vrot.slane %v1788, 1
    %v1790 = vadd.f32 %v1788, %v1789
    %v1791 = vsel %vm1514, %v1775, 0.0
    %v1792 = vsel %vm1514, %v1777, 0.0
    %v1793 = vadd.f32 %v1791, %v1792
    %v1794 = vsel %vm1514, %v1779, 0.0
    %v1795 = vadd.f32 %v1793, %v1794
    %v1796 = vrot.slane %v1795, 4
    %v1797 = vadd.f32 %v1795, %v1796
    %v1798 = vrot.slane %v1797, 2
    %v1799 = vadd.f32 %v1797, %v1798
    %v1800 = vrot.slane %v1799, 1
    %v1801 = vadd.f32 %v1799, %v1800
    %v1802 = vrcp.pop %v1790
    %v1803 = vmul.f32 %v1769, %v1802
    %v1804 = vmul.f32 %v1771, %v1802
    %v1805 = vmul.f32 %v1773, %v1802
    %v1806 = vrcp.pop %v1801
    %v1807 = vmul.f32 %v1775, %v1806
    %v1808 = vmul.f32 %v1777, %v1806
    %v1809 = vmul.f32 %v1779, %v1806
    %1811 = vset.pattern.permute.xlu0 0
    %1812 = vperm.xlu0 %1811, %v1803
    %v1813 = vpop.permute.xlu0 %1812
    %1816 = vset.pattern.permute.xlu0 0
    %1817 = vperm.xlu0 %1816, %v1804
    %v1818 = vpop.permute.xlu0 %1817
    %1821 = vset.pattern.permute.xlu0 0
    %1822 = vperm.xlu0 %1821, %v1805
    %v1823 = vpop.permute.xlu0 %1822
    %1826 = vset.pattern.permute.xlu0 0
    %1827 = vperm.xlu0 %1826, %v1807
    %v1828 = vpop.permute.xlu0 %1827
    %1831 = vset.pattern.permute.xlu0 0
    %1832 = vperm.xlu0 %1831, %v1808
    %v1833 = vpop.permute.xlu0 %1832
    %1836 = vset.pattern.permute.xlu0 0
    %1837 = vperm.xlu0 %1836, %v1809
    %v1838 = vpop.permute.xlu0 %1837
    %v1840 = vmul.f32 %v1813, %v1341
    %v1841 = vmul.f32 %v1818, %v1344
    %v1842 = vmul.f32 %v1823, %v1418
    %v1843 = vmul.f32 %v1828, %v1349
    %v1844 = vmul.f32 %v1833, %v1352
    %v1845 = vmul.f32 %v1838, %v1421
    %v1846 = vsel %vm210, %v1840, 0.0
    %v1847 = vsel %vm210, %v1841, 0.0
    %v1848 = vadd.f32 %v1846, %v1847
    %v1849 = vsel %vm210, %v1842, 0.0
    %v1850 = vadd.f32 %v1848, %v1849
    %v1851 = vrot.slane %v1850, 4
    %v1852 = vadd.f32 %v1850, %v1851
    %v1853 = vrot.slane %v1852, 2
    %v1854 = vadd.f32 %v1852, %v1853
    %v1855 = vrot.slane %v1854, 1
    %v1856 = vadd.f32 %v1854, %v1855
    %v1857 = vsel %vm210, %v1843, 0.0
    %v1858 = vsel %vm210, %v1844, 0.0
    %v1859 = vadd.f32 %v1857, %v1858
    %v1860 = vsel %vm210, %v1845, 0.0
    %v1861 = vadd.f32 %v1859, %v1860
    %v1862 = vrot.slane %v1861, 4
    %v1863 = vadd.f32 %v1861, %v1862
    %v1864 = vrot.slane %v1863, 2
    %v1865 = vadd.f32 %v1863, %v1864
    %v1866 = vrot.slane %v1865, 1
    %v1867 = vadd.f32 %v1865, %v1866
    %v1870 = vsel %vm382, %v1578, %v1571
    %v1874 = vsel %vm382, %v1867, %v1856
    %1875 = vrot.lane.b32.xlu0 %v1874, 32
    %v1876 = vpop.permute.xlu0 %1875
    %v1878 = vsel %vm210, %v1870, %v1876
    %v1879 = vld [vmem:[#allocation6 + $0x90] sm:$0xf]
    %v1880 = vld [vmem:[#allocation6 + $0x94] sm:$0xf]
    %v1881 = vld [vmem:[#allocation6 + $0x98] sm:$0xf]
    %v1882 = vld [vmem:[#allocation6 + $0x9c] sm:$0xf]
    %v1883 = vld [vmem:[#allocation6 + $0xa0] sm:$0xf]
    %v1884 = vld [vmem:[#allocation6 + $0xa4] sm:$0xf]
    %v1885 = vld [vmem:[#allocation6 + $0xa8] sm:$0xf]
    %v1886 = vld [vmem:[#allocation6 + $0xac] sm:$0xf]
    %v1887 = vpack.c.bf16 %v1878, %v1878
    %v1888 = vld [vmem:[%s4 + $0x8] sm:$0x1]
    %v1889 = vlaneseq
    %v1890 = vshrl.u32 %v1889, 7
    %v1891 = vsub.s32 0, %v1890
    %v1892 = vrot.slane %v1888, %v1891
    %v1901 = vunpack.c.l.b16 %v1879
    %v1902 = vunpack.c.l.b16 %v1880
    %v1903 = vunpack.c.l.b16 %v1881
    %v1904 = vunpack.c.l.b16 %v1882
    %v1905 = vunpack.c.l.b16 %v1883
    %v1906 = vunpack.c.l.b16 %v1884
    %v1907 = vunpack.c.l.b16 %v1885
    %v1908 = vunpack.c.l.b16 %v1886
    %v1909 = vpack.c.b16 %v1902, %v1901
    %v1910 = vpack.c.b16 %v1904, %v1903
    %v1911 = vpack.c.b16 %v1906, %v1905
    %v1912 = vpack.c.b16 %v1908, %v1907
    %v1918 = vsel %vm139, %v1887, 0
    %1920 = vmatprep.subr.bf16.mxu0 0
    %1921 = vmatpush1.bf16.msra.mxu0 %v1909
    %1922 = vmatprep.subr.bf16.mxu0 0
    %1923 = vmatpush1.bf16.msra.mxu0 %v1910
    %1924 = vmatprep.subr.bf16.mxu0 0
    %1925 = vmatpush1.bf16.msra.mxu0 %v1911
    %1926 = vmatprep.subr.bf16.mxu0 0
    %1927 = vmatpush1.bf16.msra.mxu0 %v1912
    %1928 = vmatprep.subr.bf16.mxu0 0
    %1929 = vmatpush1.bf16.msra.mxu0 0
    %1930 = vmatprep.subr.bf16.mxu0 0
    %1931 = vmatpush1.bf16.msra.mxu0 0
    %1932 = vmatprep.subr.bf16.mxu0 0
    %1933 = vmatpush1.bf16.msra.mxu0 0
    %1934 = vmatprep.subr.bf16.mxu0 0
    %1935 = vmatpush1.bf16.msra.mxu0 0
    %1936 = vmatprep.subr.bf16.mxu0 0
    %1937 = vmatpush1.bf16.msra.mxu0 0
    %1938 = vmatprep.subr.bf16.mxu0 0
    %1939 = vmatpush1.bf16.msra.mxu0 0
    %1940 = vmatprep.subr.bf16.mxu0 0
    %1941 = vmatpush1.bf16.msra.mxu0 0
    %1942 = vmatprep.subr.bf16.mxu0 0
    %1943 = vmatpush1.bf16.msra.mxu0 0
    %1944 = vmatprep.subr.bf16.mxu0 0
    %1945 = vmatpush1.bf16.msra.mxu0 0
    %1946 = vmatprep.subr.bf16.mxu0 0
    %1947 = vmatpush1.bf16.msra.mxu0 0
    %1948 = vmatprep.subr.bf16.mxu0 0
    %1949 = vmatpush1.bf16.msra.mxu0 0
    %1950 = vmatprep.subr.bf16.mxu0 0
    %1951 = vmatpush1.bf16.msra.mxu0 0
    %1952 = vmatprep.mubr.bf16.mxu0 0
    %1953 = vmatmul.mubr.bf16.gmra.mrb[0].mxu0 %v1918
    %v1954 = vpop.f32.mrb[0].mxu0
    %v1955 = vadd.f32 %v1892, %v1954
    %v1956 = vpop.f32.mrb[0].mxu0
    %v1957 = vpop.f32.mrb[0].mxu0
    %v1958 = vpop.f32.mrb[0].mxu0
    %1959 = vdwg.mxu0
    %vm1960 = vcmask 517120
    %v1961 = vsel %vm1960, %v1955, 0.0
    %1962 = vadd.xlane.f32.xlu0 %v1961
    %v1963 = vpop.xlane.xlu0 %1962
    %v1964 = vrcp.pop 64.0
    %v1965 = vmul.f32 %v1963, %v1964
    %v1966 = vsub.f32 %v1955, %v1965
    %v1967 = vmul.f32 %v1966, %v1966
    %v1968 = vsel %vm1960, %v1967, 0.0
    %1969 = vadd.xlane.f32.xlu0 %v1968
    %v1970 = vpop.xlane.xlu0 %1969
    %v1971 = vrcp.pop 63.0
    %v1972 = vmul.f32 %v1970, %v1971
    %v1973 = vrsqrt.pop %v1972
    %v1974 = vmul.f32 %v1972, %v1973
    %vm1975 = vcmp.eq.f32.partialorder %v1972, inf
    %v1976 = vsel %vm1975, %v1972, %v1974
    %vm1977 = vcmp.eq.f32.partialorder %v1972, 0.0
    %v1978 = vand.u32 %v1972, 2147483648
    %v1979 = vsel %vm1977, %v1978, %v1976
    %v1980 = vld [vmem:[%s4 + $0x9] sm:$0x1]
    %v1981 = vlaneseq
    %v1982 = vshrl.u32 %v1981, 7
    %v1983 = vsub.s32 0, %v1982
    %v1984 = vrot.slane %v1980, %v1983
    %v1985 = vmul.f32 %v1984, %v1966
    %v1986 = vadd.f32 %v1979, 1e-06
    %v1987 = vrcp.pop %v1986
    %v1988 = vmul.f32 %v1985, %v1987
    %v1989 = vld [vmem:[%s4 + $0xa] sm:$0x1]
    %v1990 = vlaneseq
    %v1991 = vshrl.u32 %v1990, 7
    %v1992 = vsub.s32 0, %v1991
    %v1993 = vrot.slane %v1989, %v1992
    %v1994 = vadd.f32 %v1988, %v1993
    %v1995 = vld [vmem:[#allocation6 + $0xb0] sm:$0xf]
    %v1996 = vld [vmem:[#allocation6 + $0xb4] sm:$0xf]
    %v1997 = vld [vmem:[#allocation6 + $0xb8] sm:$0xf]
    %v1998 = vld [vmem:[#allocation6 + $0xbc] sm:$0xf]
    %v1999 = vld [vmem:[#allocation6 + $0xc0] sm:$0xf]
    %v2000 = vld [vmem:[#allocation6 + $0xc4] sm:$0xf]
    %v2001 = vld [vmem:[#allocation6 + $0xc8] sm:$0xf]
    %v2002 = vld [vmem:[#allocation6 + $0xcc] sm:$0xf]
    %v2003 = vpack.c.bf16 %v1994, %v1994
    %v2004 = vld [vmem:[%s4 + $0xb] sm:$0x1]
    %v2005 = vlaneseq
    %v2006 = vshrl.u32 %v2005, 7
    %v2007 = vsub.s32 0, %v2006
    %v2008 = vrot.slane %v2004, %v2007
    %v2017 = vunpack.c.l.b16 %v1995
    %v2018 = vunpack.c.l.b16 %v1996
    %v2019 = vunpack.c.l.b16 %v1997
    %v2020 = vunpack.c.l.b16 %v1998
    %v2021 = vunpack.c.l.b16 %v1999
    %v2022 = vunpack.c.l.b16 %v2000
    %v2023 = vunpack.c.l.b16 %v2001
    %v2024 = vunpack.c.l.b16 %v2002
    %v2025 = vpack.c.b16 %v2018, %v2017
    %v2026 = vpack.c.b16 %v2020, %v2019
    %v2027 = vpack.c.b16 %v2022, %v2021
    %v2028 = vpack.c.b16 %v2024, %v2023
    %v2034 = vsel %vm139, %v2003, 0
    %2036 = vmatprep.subr.bf16.mxu0 0
    %2037 = vmatpush1.bf16.msra.mxu0 %v2025
    %2038 = vmatprep.subr.bf16.mxu0 0
    %2039 = vmatpush1.bf16.msra.mxu0 %v2026
    %2040 = vmatprep.subr.bf16.mxu0 0
    %2041 = vmatpush1.bf16.msra.mxu0 %v2027
    %2042 = vmatprep.subr.bf16.mxu0 0
    %2043 = vmatpush1.bf16.msra.mxu0 %v2028
    %2044 = vmatprep.subr.bf16.mxu0 0
    %2045 = vmatpush1.bf16.msra.mxu0 0
    %2046 = vmatprep.subr.bf16.mxu0 0
    %2047 = vmatpush1.bf16.msra.mxu0 0
    %2048 = vmatprep.subr.bf16.mxu0 0
    %2049 = vmatpush1.bf16.msra.mxu0 0
    %2050 = vmatprep.subr.bf16.mxu0 0
    %2051 = vmatpush1.bf16.msra.mxu0 0
    %2052 = vmatprep.subr.bf16.mxu0 0
    %2053 = vmatpush1.bf16.msra.mxu0 0
    %2054 = vmatprep.subr.bf16.mxu0 0
    %2055 = vmatpush1.bf16.msra.mxu0 0
    %2056 = vmatprep.subr.bf16.mxu0 0
    %2057 = vmatpush1.bf16.msra.mxu0 0
    %2058 = vmatprep.subr.bf16.mxu0 0
    %2059 = vmatpush1.bf16.msra.mxu0 0
    %2060 = vmatprep.subr.bf16.mxu0 0
    %2061 = vmatpush1.bf16.msra.mxu0 0
    %2062 = vmatprep.subr.bf16.mxu0 0
    %2063 = vmatpush1.bf16.msra.mxu0 0
    %2064 = vmatprep.subr.bf16.mxu0 0
    %2065 = vmatpush1.bf16.msra.mxu0 0
    %2066 = vmatprep.subr.bf16.mxu0 0
    %2067 = vmatpush1.bf16.msra.mxu0 0
    %2068 = vmatprep.mubr.bf16.mxu0 0
    %2069 = vmatmul.mubr.bf16.gmra.mrb[0].mxu0 %v2034
    %v2070 = vpop.f32.mrb[0].mxu0
    %v2071 = vadd.f32 %v2008, %v2070
    %v2072 = vpop.f32.mrb[0].mxu0
    %v2073 = vpop.f32.mrb[0].mxu0
    %v2074 = vpop.f32.mrb[0].mxu0
    %2075 = vdwg.mxu0
    %v2076 = vxor.u32 %v2071, 2147483648
    %v2077 = vmul.f32 %v2076, 1.442695
    %v2078 = vpow.pop %v2077
    %v2079 = vadd.f32 %v2078, 1.0
    %v2080 = vrcp.pop %v2079
    %v2081 = vmul.f32 1.0, %v2080
    %vm2082 = vcmask 74752
    %2083 = vst.msk [vmem:[#allocation8] sm:$0x3] %vm2082, %v2081
    // Predicated region
    $region30: #{net4_forward.1} parent=1 // pred_check
      _
    $region31: #{net4_forward.1} parent=1 // pred_check_branch
      %2085 = sbr.rel (0) target = $region33
    $region32: #{net4_forward.1} parent=1 // pred_region
      %s2087 = ssub.s32 32, 32
      %2088 = vsyncadd [#allocation5], %s2087
      %s2090 = sshll.u32 [#allocation8], 4
      %s2091 = int_to_ptr.vmem [resolvable:$true] %s2090
      %2093 = dma.vmem_to_hbm [thread:$0]  %s2091, 32, %s5, [#allocation5]
    $region33: #{net4_forward.1} parent=1 // pred_fallthru
      _
    // Predicated region
    $region34: #{net4_forward.1} parent=1 // pred_check
      _
    $region35: #{net4_forward.1} parent=1 // pred_check_branch
      %2095 = sbr.rel (0) target = $region37
    $region36: #{net4_forward.1} parent=1 // pred_region
      %2096 = dma.done [#allocation5], 32
    $region37: #{net4_forward.1} parent=1 // pred_fallthru
      _
    %2097 = vsyncpa [#allocation4], 1
    %2098 = vsyncpa [#allocation7], 1
    %2099 = vsyncpa [#allocation5], 1

</llo_original>
